<compile_context>
chip_gen: v6e
topology: v6e:2x2x1
jax: 0.10.0
libtpu: 0.0.40
codegen_flags: <defaults>
</compile_context>

<pallas_src>
import functools

import jax
import jax.numpy as jnp
from jax import lax
from jax.experimental import pallas as pl
from jax.experimental.pallas import tpu as pltpu


def _round_up(v, m):
    return (v + m - 1) // m * m


def _pick_nb(N, per_image_bytes, target_bytes):
    """Largest divisor of N whose block is <= target, keeping >=2 grid steps."""
    nb = max(1, min(N, target_bytes // max(per_image_bytes, 1)))
    while N % nb:
        nb -= 1
    if N // nb < 2 and N > 1:          # leave work for both v7x TensorCores
        nb = max(1, nb // 2)
        while N % nb:
            nb -= 1
    return int(nb)


def _spatial_attention_kernel(w_ref, x_ref, o_ref, pmax_ref, pavg_ref, *,
                              K, H, W, NB):
    # w_ref   : SMEM f32[2*K*K + 1]  (max-channel taps, avg-channel taps, bias)
    # x_ref   : VMEM (NB, C, H*W)    lane-dense batch block
    # o_ref   : VMEM (NB, C, H*W)
    # p*_ref  : VMEM (NB, Hp, Wp)    zero-padded conv slabs (scratch)
    P = K // 2
    HW = H * W

    # ---- channel-wise max / mean on the lane-dense block ------------------
    xb = x_ref[...].astype(jnp.float32)                 # dies after reductions
    max_map = jnp.max(xb, axis=1)                       # (NB, HW)
    avg_map = jnp.mean(xb, axis=1)                      # (NB, HW)

    # ---- zero-padded slabs for the SAME KxK conv (no concatenates) --------
    # Full-slab zero store is unmasked; the interior store is tiny (H*W elems).
    pmax_ref[...] = jnp.zeros_like(pmax_ref)
    pavg_ref[...] = jnp.zeros_like(pavg_ref)
    pmax_ref[:, P:P + H, P:P + W] = max_map.reshape(NB, H, W)
    pavg_ref[:, P:P + H, P:P + W] = avg_map.reshape(NB, H, W)

    # ---- unrolled KxK conv, 2 in-ch -> 1 out-ch ----------------------------
    # One lane-offset slice per kw per map; kh slices below are sublane-only.
    # Four partial accumulators keep the VALU slots co-issuing.
    acc_m0 = jnp.zeros((NB, H, W), jnp.float32)
    acc_m1 = jnp.zeros((NB, H, W), jnp.float32)
    acc_a0 = jnp.zeros((NB, H, W), jnp.float32)
    acc_a1 = jnp.zeros((NB, H, W), jnp.float32)
    for kw in range(K):
        pm_kw = pmax_ref[:, 0:H + 2 * P, kw:kw + W]     # (NB, H+2P, W)
        pa_kw = pavg_ref[:, 0:H + 2 * P, kw:kw + W]
        for kh in range(K):
            w_m = w_ref[kh * K + kw]
            w_a = w_ref[K * K + kh * K + kw]
            t_m = pm_kw[:, kh:kh + H, :]
            t_a = pa_kw[:, kh:kh + H, :]
            if kw % 2 == 0:
                acc_m0 = acc_m0 + w_m * t_m
                acc_a0 = acc_a0 + w_a * t_a
            else:
                acc_m1 = acc_m1 + w_m * t_m
                acc_a1 = acc_a1 + w_a * t_a

    logits = (acc_m0 + acc_m1) + (acc_a0 + acc_a1) + w_ref[2 * K * K]
    gate = jax.nn.sigmoid(logits).reshape(NB, 1, HW)    # (NB, 1, H*W)

    # ---- apply the spatial gate on the lane-dense layout -------------------
    o_ref[...] = (x_ref[...].astype(jnp.float32) * gate).astype(o_ref.dtype)


def spatial_attention(x, weight, bias, *, kernel_size=7,
                      target_block_bytes=1 << 20):
    """x: (N, C, H, W); weight: (1, 2, K, K); bias: (1,). Returns (N, C, H, W)."""
    N, C, H, W = x.shape
    K = kernel_size
    P = K // 2
    HW = H * W

    # Lane-dense view of the streaming tensor (free, contiguous reshape).
    x_flat = x.reshape(N, C, HW)

    # Flat SMEM weights: [max-channel taps, avg-channel taps, bias].
    w_flat = jnp.concatenate(
        [weight[0, 0].reshape(-1),
         weight[0, 1].reshape(-1),
         bias.reshape(-1)]).astype(jnp.float32)

    per_image_bytes = C * HW * x.dtype.itemsize
    NB = _pick_nb(N, per_image_bytes, target_block_bytes)

    # Padded slab dims (zero border of width P), rounded to (8, 128) tiles.
    Hp = _round_up(H + 2 * P, 8)
    Wp = _round_up(W + 2 * P, 128)

    kernel = functools.partial(_spatial_attention_kernel, K=K, H=H, W=W, NB=NB)

    out_flat = pl.pallas_call(
        kernel,
        out_shape=jax.ShapeDtypeStruct((N, C, HW), x.dtype),
        grid=(N // NB,),
        in_specs=[
            pl.BlockSpec(memory_space=pltpu.MemorySpace.SMEM),        # weights
            pl.BlockSpec((NB, C, HW), lambda n: (n, 0, 0)),           # x
        ],
        out_specs=pl.BlockSpec((NB, C, HW), lambda n: (n, 0, 0)),
        scratch_shapes=[
            pltpu.VMEM((NB, Hp, Wp), jnp.float32),                    # max slab
            pltpu.VMEM((NB, Hp, Wp), jnp.float32),                    # avg slab
        ],
        compiler_params=pltpu.CompilerParams(
            dimension_semantics=("parallel",),
            vmem_limit_bytes=32 * 1024 * 1024),
    )(w_flat, x_flat)

    return out_flat.reshape(N, C, H, W)


def spatial_attention_ref(x, weight, bias):
    """Pure-JAX reference, mirroring the PyTorch forward."""
    max_r = jnp.max(x, axis=1, keepdims=True)
    avg_r = jnp.mean(x, axis=1, keepdims=True)
    r = jnp.concatenate([max_r, avg_r], axis=1)
    out = lax.conv_general_dilated(
        r, weight, window_strides=(1, 1), padding="SAME",
        dimension_numbers=("NCHW", "OIHW", "NCHW"))
    out = out + bias.reshape(1, -1, 1, 1)
    return jax.nn.sigmoid(out) * x


if __name__ == "__main__":
    key = jax.random.PRNGKey(0)
    k1, k2, k3 = jax.random.split(key, 3)

    N, C, H, W = 2, 4, 16, 16
    K = 7
    x = jax.random.normal(k1, (N, C, H, W), dtype=jnp.float32)

    # Deterministic Conv2d(2, 1, 7) init (PyTorch-style uniform bounds).
    fan_in = 2 * K * K
    bound = 1.0 / (fan_in ** 0.5)
    weight = jax.random.uniform(k2, (1, 2, K, K), jnp.float32, -bound, bound)
    bias = jax.random.uniform(k3, (1,), jnp.float32, -bound, bound)

    out = jax.block_until_ready(spatial_attention(x, weight, bias, kernel_size=K))
    ref = spatial_attention_ref(x, weight, bias)

    assert out.shape == x.shape, (out.shape, x.shape)
    assert jnp.allclose(out, ref, atol=1e-5, rtol=1e-5), float(
        jnp.max(jnp.abs(out - ref)))
    print("KERNEL_OK")
</pallas_src>

<mosaic_0001>
module attributes {stable_mosaic.version = 11 : i64} {
  func.func @_spatial_attention_kernel(%arg0: i32, %arg1: memref<99xf32, #tpu.memory_space<smem>>, %arg2: memref<1x4x256xf32, #tpu.memory_space<vmem>>, %arg3: memref<1x4x256xf32, #tpu.memory_space<vmem>>, %arg4: memref<1x24x128xf32, #tpu.memory_space<vmem>>, %arg5: memref<1x24x128xf32, #tpu.memory_space<vmem>>) attributes {dimension_semantics = [#tpu.dimension_semantics<parallel>], iteration_bounds = array<i64: 2>, scalar_prefetch = 0 : i64, scratch_operands = 2 : i64, tpu.core_type = #tpu.core_type<tc>, window_params = [{transform_indices = @transform_0, window_bounds = array<i64: 99>}, {transform_indices = @transform_1, window_bounds = array<i64: 1, 4, 256>}, {transform_indices = @transform_2, window_bounds = array<i64: 1, 4, 256>}]} {
    %c0 = arith.constant 0 : index
    %c0_0 = arith.constant 0 : index
    %c0_1 = arith.constant 0 : index
    %0 = vector.load %arg2[%c0, %c0_0, %c0_1] : memref<1x4x256xf32, #tpu.memory_space<vmem>>, vector<1x4x256xf32>
    %cst = arith.constant dense<0xFF800000> : vector<1x256xf32>
    %1 = vector.multi_reduction <maximumf>, %0, %cst [1] : vector<1x4x256xf32> to vector<1x256xf32>
    %cst_2 = arith.constant dense<0.000000e+00> : vector<1x256xf32>
    %2 = vector.multi_reduction <add>, %0, %cst_2 [1] : vector<1x4x256xf32> to vector<1x256xf32>
    %cst_3 = arith.constant 4.000000e+00 : f32
    %3 = vector.broadcast %cst_3 : f32 to vector<1x256xf32>
    %4 = arith.divf %2, %3 : vector<1x256xf32>
    %cst_4 = arith.constant 0.000000e+00 : f32
    %5 = vector.broadcast %cst_4 : f32 to vector<1x24x128xf32>
    %c0_5 = arith.constant 0 : index
    %c0_6 = arith.constant 0 : index
    %c0_7 = arith.constant 0 : index
    %6 = vector.load %arg4[%c0_5, %c0_6, %c0_7] : memref<1x24x128xf32, #tpu.memory_space<vmem>>, vector<1x24x128xf32>
    tpu.vector_store %arg4[%c0_5, %c0_6, %c0_7], %5 {strides = array<i32>} : memref<1x24x128xf32, #tpu.memory_space<vmem>>, vector<1x24x128xf32>,
    %cst_8 = arith.constant 0.000000e+00 : f32
    %7 = vector.broadcast %cst_8 : f32 to vector<1x24x128xf32>
    %c0_9 = arith.constant 0 : index
    %c0_10 = arith.constant 0 : index
    %c0_11 = arith.constant 0 : index
    %8 = vector.load %arg5[%c0_9, %c0_10, %c0_11] : memref<1x24x128xf32, #tpu.memory_space<vmem>>, vector<1x24x128xf32>
    tpu.vector_store %arg5[%c0_9, %c0_10, %c0_11], %7 {strides = array<i32>} : memref<1x24x128xf32, #tpu.memory_space<vmem>>, vector<1x24x128xf32>,
    %9 = vector.shape_cast %1 : vector<1x256xf32> to vector<1x16x16xf32>
    %c0_12 = arith.constant 0 : index
    %c3 = arith.constant 3 : index
    %c3_13 = arith.constant 3 : index
    %10 = vector.load %arg4[%c0_12, %c3, %c3_13] : memref<1x24x128xf32, #tpu.memory_space<vmem>>, vector<1x16x16xf32>
    tpu.vector_store %arg4[%c0_12, %c3, %c3_13], %9 {strides = array<i32>} : memref<1x24x128xf32, #tpu.memory_space<vmem>>, vector<1x16x16xf32>,
    %11 = vector.shape_cast %4 : vector<1x256xf32> to vector<1x16x16xf32>
    %c0_14 = arith.constant 0 : index
    %c3_15 = arith.constant 3 : index
    %c3_16 = arith.constant 3 : index
    %12 = vector.load %arg5[%c0_14, %c3_15, %c3_16] : memref<1x24x128xf32, #tpu.memory_space<vmem>>, vector<1x16x16xf32>
    tpu.vector_store %arg5[%c0_14, %c3_15, %c3_16], %11 {strides = array<i32>} : memref<1x24x128xf32, #tpu.memory_space<vmem>>, vector<1x16x16xf32>,
    %cst_17 = arith.constant 0.000000e+00 : f32
    %13 = vector.broadcast %cst_17 : f32 to vector<1x16x16xf32>
    %cst_18 = arith.constant 0.000000e+00 : f32
    %14 = vector.broadcast %cst_18 : f32 to vector<1x16x16xf32>
    %cst_19 = arith.constant 0.000000e+00 : f32
    %15 = vector.broadcast %cst_19 : f32 to vector<1x16x16xf32>
    %cst_20 = arith.constant 0.000000e+00 : f32
    %16 = vector.broadcast %cst_20 : f32 to vector<1x16x16xf32>
    %c0_21 = arith.constant 0 : index
    %c0_22 = arith.constant 0 : index
    %c0_23 = arith.constant 0 : index
    %17 = vector.load %arg4[%c0_21, %c0_22, %c0_23] : memref<1x24x128xf32, #tpu.memory_space<vmem>>, vector<1x22x16xf32>
    %c0_24 = arith.constant 0 : index
    %c0_25 = arith.constant 0 : index
    %c0_26 = arith.constant 0 : index
    %18 = vector.load %arg5[%c0_24, %c0_25, %c0_26] : memref<1x24x128xf32, #tpu.memory_space<vmem>>, vector<1x22x16xf32>
    %c0_27 = arith.constant 0 : index
    %19 = memref.load %arg1[%c0_27] : memref<99xf32, #tpu.memory_space<smem>>
    %c49 = arith.constant 49 : index
    %20 = memref.load %arg1[%c49] : memref<99xf32, #tpu.memory_space<smem>>
    %21 = vector.extract_strided_slice %17 {offsets = [0, 0, 0], sizes = [1, 16, 16], strides = [1, 1, 1]} : vector<1x22x16xf32> to vector<1x16x16xf32>
    %22 = vector.extract_strided_slice %18 {offsets = [0, 0, 0], sizes = [1, 16, 16], strides = [1, 1, 1]} : vector<1x22x16xf32> to vector<1x16x16xf32>
    %23 = vector.broadcast %19 : f32 to vector<1x16x16xf32>
    %24 = arith.mulf %23, %21 : vector<1x16x16xf32>
    %25 = arith.addf %13, %24 : vector<1x16x16xf32>
    %26 = vector.broadcast %20 : f32 to vector<1x16x16xf32>
    %27 = arith.mulf %26, %22 : vector<1x16x16xf32>
    %28 = arith.addf %15, %27 : vector<1x16x16xf32>
    %c7 = arith.constant 7 : index
    %29 = memref.load %arg1[%c7] : memref<99xf32, #tpu.memory_space<smem>>
    %c56 = arith.constant 56 : index
    %30 = memref.load %arg1[%c56] : memref<99xf32, #tpu.memory_space<smem>>
    %31 = vector.extract_strided_slice %17 {offsets = [0, 1, 0], sizes = [1, 16, 16], strides = [1, 1, 1]} : vector<1x22x16xf32> to vector<1x16x16xf32>
    %32 = vector.extract_strided_slice %18 {offsets = [0, 1, 0], sizes = [1, 16, 16], strides = [1, 1, 1]} : vector<1x22x16xf32> to vector<1x16x16xf32>
    %33 = vector.broadcast %29 : f32 to vector<1x16x16xf32>
    %34 = arith.mulf %33, %31 : vector<1x16x16xf32>
    %35 = arith.addf %25, %34 : vector<1x16x16xf32>
    %36 = vector.broadcast %30 : f32 to vector<1x16x16xf32>
    %37 = arith.mulf %36, %32 : vector<1x16x16xf32>
    %38 = arith.addf %28, %37 : vector<1x16x16xf32>
    %c14 = arith.constant 14 : index
    %39 = memref.load %arg1[%c14] : memref<99xf32, #tpu.memory_space<smem>>
    %c63 = arith.constant 63 : index
    %40 = memref.load %arg1[%c63] : memref<99xf32, #tpu.memory_space<smem>>
    %41 = vector.extract_strided_slice %17 {offsets = [0, 2, 0], sizes = [1, 16, 16], strides = [1, 1, 1]} : vector<1x22x16xf32> to vector<1x16x16xf32>
    %42 = vector.extract_strided_slice %18 {offsets = [0, 2, 0], sizes = [1, 16, 16], strides = [1, 1, 1]} : vector<1x22x16xf32> to vector<1x16x16xf32>
    %43 = vector.broadcast %39 : f32 to vector<1x16x16xf32>
    %44 = arith.mulf %43, %41 : vector<1x16x16xf32>
    %45 = arith.addf %35, %44 : vector<1x16x16xf32>
    %46 = vector.broadcast %40 : f32 to vector<1x16x16xf32>
    %47 = arith.mulf %46, %42 : vector<1x16x16xf32>
    %48 = arith.addf %38, %47 : vector<1x16x16xf32>
    %c21 = arith.constant 21 : index
    %49 = memref.load %arg1[%c21] : memref<99xf32, #tpu.memory_space<smem>>
    %c70 = arith.constant 70 : index
    %50 = memref.load %arg1[%c70] : memref<99xf32, #tpu.memory_space<smem>>
    %51 = vector.extract_strided_slice %17 {offsets = [0, 3, 0], sizes = [1, 16, 16], strides = [1, 1, 1]} : vector<1x22x16xf32> to vector<1x16x16xf32>
    %52 = vector.extract_strided_slice %18 {offsets = [0, 3, 0], sizes = [1, 16, 16], strides = [1, 1, 1]} : vector<1x22x16xf32> to vector<1x16x16xf32>
    %53 = vector.broadcast %49 : f32 to vector<1x16x16xf32>
    %54 = arith.mulf %53, %51 : vector<1x16x16xf32>
    %55 = arith.addf %45, %54 : vector<1x16x16xf32>
    %56 = vector.broadcast %50 : f32 to vector<1x16x16xf32>
    %57 = arith.mulf %56, %52 : vector<1x16x16xf32>
    %58 = arith.addf %48, %57 : vector<1x16x16xf32>
    %c28 = arith.constant 28 : index
    %59 = memref.load %arg1[%c28] : memref<99xf32, #tpu.memory_space<smem>>
    %c77 = arith.constant 77 : index
    %60 = memref.load %arg1[%c77] : memref<99xf32, #tpu.memory_space<smem>>
    %61 = vector.extract_strided_slice %17 {offsets = [0, 4, 0], sizes = [1, 16, 16], strides = [1, 1, 1]} : vector<1x22x16xf32> to vector<1x16x16xf32>
    %62 = vector.extract_strided_slice %18 {offsets = [0, 4, 0], sizes = [1, 16, 16], strides = [1, 1, 1]} : vector<1x22x16xf32> to vector<1x16x16xf32>
    %63 = vector.broadcast %59 : f32 to vector<1x16x16xf32>
    %64 = arith.mulf %63, %61 : vector<1x16x16xf32>
    %65 = arith.addf %55, %64 : vector<1x16x16xf32>
    %66 = vector.broadcast %60 : f32 to vector<1x16x16xf32>
    %67 = arith.mulf %66, %62 : vector<1x16x16xf32>
    %68 = arith.addf %58, %67 : vector<1x16x16xf32>
    %c35 = arith.constant 35 : index
    %69 = memref.load %arg1[%c35] : memref<99xf32, #tpu.memory_space<smem>>
    %c84 = arith.constant 84 : index
    %70 = memref.load %arg1[%c84] : memref<99xf32, #tpu.memory_space<smem>>
    %71 = vector.extract_strided_slice %17 {offsets = [0, 5, 0], sizes = [1, 16, 16], strides = [1, 1, 1]} : vector<1x22x16xf32> to vector<1x16x16xf32>
    %72 = vector.extract_strided_slice %18 {offsets = [0, 5, 0], sizes = [1, 16, 16], strides = [1, 1, 1]} : vector<1x22x16xf32> to vector<1x16x16xf32>
    %73 = vector.broadcast %69 : f32 to vector<1x16x16xf32>
    %74 = arith.mulf %73, %71 : vector<1x16x16xf32>
    %75 = arith.addf %65, %74 : vector<1x16x16xf32>
    %76 = vector.broadcast %70 : f32 to vector<1x16x16xf32>
    %77 = arith.mulf %76, %72 : vector<1x16x16xf32>
    %78 = arith.addf %68, %77 : vector<1x16x16xf32>
    %c42 = arith.constant 42 : index
    %79 = memref.load %arg1[%c42] : memref<99xf32, #tpu.memory_space<smem>>
    %c91 = arith.constant 91 : index
    %80 = memref.load %arg1[%c91] : memref<99xf32, #tpu.memory_space<smem>>
    %81 = vector.extract_strided_slice %17 {offsets = [0, 6, 0], sizes = [1, 16, 16], strides = [1, 1, 1]} : vector<1x22x16xf32> to vector<1x16x16xf32>
    %82 = vector.extract_strided_slice %18 {offsets = [0, 6, 0], sizes = [1, 16, 16], strides = [1, 1, 1]} : vector<1x22x16xf32> to vector<1x16x16xf32>
    %83 = vector.broadcast %79 : f32 to vector<1x16x16xf32>
    %84 = arith.mulf %83, %81 : vector<1x16x16xf32>
    %85 = arith.addf %75, %84 : vector<1x16x16xf32>
    %86 = vector.broadcast %80 : f32 to vector<1x16x16xf32>
    %87 = arith.mulf %86, %82 : vector<1x16x16xf32>
    %88 = arith.addf %78, %87 : vector<1x16x16xf32>
    %c0_28 = arith.constant 0 : index
    %c0_29 = arith.constant 0 : index
    %c1 = arith.constant 1 : index
    %89 = vector.load %arg4[%c0_28, %c0_29, %c1] : memref<1x24x128xf32, #tpu.memory_space<vmem>>, vector<1x22x16xf32>
    %c0_30 = arith.constant 0 : index
    %c0_31 = arith.constant 0 : index
    %c1_32 = arith.constant 1 : index
    %90 = vector.load %arg5[%c0_30, %c0_31, %c1_32] : memref<1x24x128xf32, #tpu.memory_space<vmem>>, vector<1x22x16xf32>
    %c1_33 = arith.constant 1 : index
    %91 = memref.load %arg1[%c1_33] : memref<99xf32, #tpu.memory_space<smem>>
    %c50 = arith.constant 50 : index
    %92 = memref.load %arg1[%c50] : memref<99xf32, #tpu.memory_space<smem>>
    %93 = vector.extract_strided_slice %89 {offsets = [0, 0, 0], sizes = [1, 16, 16], strides = [1, 1, 1]} : vector<1x22x16xf32> to vector<1x16x16xf32>
    %94 = vector.extract_strided_slice %90 {offsets = [0, 0, 0], sizes = [1, 16, 16], strides = [1, 1, 1]} : vector<1x22x16xf32> to vector<1x16x16xf32>
    %95 = vector.broadcast %91 : f32 to vector<1x16x16xf32>
    %96 = arith.mulf %95, %93 : vector<1x16x16xf32>
    %97 = arith.addf %14, %96 : vector<1x16x16xf32>
    %98 = vector.broadcast %92 : f32 to vector<1x16x16xf32>
    %99 = arith.mulf %98, %94 : vector<1x16x16xf32>
    %100 = arith.addf %16, %99 : vector<1x16x16xf32>
    %c8 = arith.constant 8 : index
    %101 = memref.load %arg1[%c8] : memref<99xf32, #tpu.memory_space<smem>>
    %c57 = arith.constant 57 : index
    %102 = memref.load %arg1[%c57] : memref<99xf32, #tpu.memory_space<smem>>
    %103 = vector.extract_strided_slice %89 {offsets = [0, 1, 0], sizes = [1, 16, 16], strides = [1, 1, 1]} : vector<1x22x16xf32> to vector<1x16x16xf32>
    %104 = vector.extract_strided_slice %90 {offsets = [0, 1, 0], sizes = [1, 16, 16], strides = [1, 1, 1]} : vector<1x22x16xf32> to vector<1x16x16xf32>
    %105 = vector.broadcast %101 : f32 to vector<1x16x16xf32>
    %106 = arith.mulf %105, %103 : vector<1x16x16xf32>
    %107 = arith.addf %97, %106 : vector<1x16x16xf32>
    %108 = vector.broadcast %102 : f32 to vector<1x16x16xf32>
    %109 = arith.mulf %108, %104 : vector<1x16x16xf32>
    %110 = arith.addf %100, %109 : vector<1x16x16xf32>
    %c15 = arith.constant 15 : index
    %111 = memref.load %arg1[%c15] : memref<99xf32, #tpu.memory_space<smem>>
    %c64 = arith.constant 64 : index
    %112 = memref.load %arg1[%c64] : memref<99xf32, #tpu.memory_space<smem>>
    %113 = vector.extract_strided_slice %89 {offsets = [0, 2, 0], sizes = [1, 16, 16], strides = [1, 1, 1]} : vector<1x22x16xf32> to vector<1x16x16xf32>
    %114 = vector.extract_strided_slice %90 {offsets = [0, 2, 0], sizes = [1, 16, 16], strides = [1, 1, 1]} : vector<1x22x16xf32> to vector<1x16x16xf32>
    %115 = vector.broadcast %111 : f32 to vector<1x16x16xf32>
    %116 = arith.mulf %115, %113 : vector<1x16x16xf32>
    %117 = arith.addf %107, %116 : vector<1x16x16xf32>
    %118 = vector.broadcast %112 : f32 to vector<1x16x16xf32>
    %119 = arith.mulf %118, %114 : vector<1x16x16xf32>
    %120 = arith.addf %110, %119 : vector<1x16x16xf32>
    %c22 = arith.constant 22 : index
    %121 = memref.load %arg1[%c22] : memref<99xf32, #tpu.memory_space<smem>>
    %c71 = arith.constant 71 : index
    %122 = memref.load %arg1[%c71] : memref<99xf32, #tpu.memory_space<smem>>
    %123 = vector.extract_strided_slice %89 {offsets = [0, 3, 0], sizes = [1, 16, 16], strides = [1, 1, 1]} : vector<1x22x16xf32> to vector<1x16x16xf32>
    %124 = vector.extract_strided_slice %90 {offsets = [0, 3, 0], sizes = [1, 16, 16], strides = [1, 1, 1]} : vector<1x22x16xf32> to vector<1x16x16xf32>
    %125 = vector.broadcast %121 : f32 to vector<1x16x16xf32>
    %126 = arith.mulf %125, %123 : vector<1x16x16xf32>
    %127 = arith.addf %117, %126 : vector<1x16x16xf32>
    %128 = vector.broadcast %122 : f32 to vector<1x16x16xf32>
    %129 = arith.mulf %128, %124 : vector<1x16x16xf32>
    %130 = arith.addf %120, %129 : vector<1x16x16xf32>
    %c29 = arith.constant 29 : index
    %131 = memref.load %arg1[%c29] : memref<99xf32, #tpu.memory_space<smem>>
    %c78 = arith.constant 78 : index
    %132 = memref.load %arg1[%c78] : memref<99xf32, #tpu.memory_space<smem>>
    %133 = vector.extract_strided_slice %89 {offsets = [0, 4, 0], sizes = [1, 16, 16], strides = [1, 1, 1]} : vector<1x22x16xf32> to vector<1x16x16xf32>
    %134 = vector.extract_strided_slice %90 {offsets = [0, 4, 0], sizes = [1, 16, 16], strides = [1, 1, 1]} : vector<1x22x16xf32> to vector<1x16x16xf32>
    %135 = vector.broadcast %131 : f32 to vector<1x16x16xf32>
    %136 = arith.mulf %135, %133 : vector<1x16x16xf32>
    %137 = arith.addf %127, %136 : vector<1x16x16xf32>
    %138 = vector.broadcast %132 : f32 to vector<1x16x16xf32>
    %139 = arith.mulf %138, %134 : vector<1x16x16xf32>
    %140 = arith.addf %130, %139 : vector<1x16x16xf32>
    %c36 = arith.constant 36 : index
    %141 = memref.load %arg1[%c36] : memref<99xf32, #tpu.memory_space<smem>>
    %c85 = arith.constant 85 : index
    %142 = memref.load %arg1[%c85] : memref<99xf32, #tpu.memory_space<smem>>
    %143 = vector.extract_strided_slice %89 {offsets = [0, 5, 0], sizes = [1, 16, 16], strides = [1, 1, 1]} : vector<1x22x16xf32> to vector<1x16x16xf32>
    %144 = vector.extract_strided_slice %90 {offsets = [0, 5, 0], sizes = [1, 16, 16], strides = [1, 1, 1]} : vector<1x22x16xf32> to vector<1x16x16xf32>
    %145 = vector.broadcast %141 : f32 to vector<1x16x16xf32>
    %146 = arith.mulf %145, %143 : vector<1x16x16xf32>
    %147 = arith.addf %137, %146 : vector<1x16x16xf32>
    %148 = vector.broadcast %142 : f32 to vector<1x16x16xf32>
    %149 = arith.mulf %148, %144 : vector<1x16x16xf32>
    %150 = arith.addf %140, %149 : vector<1x16x16xf32>
    %c43 = arith.constant 43 : index
    %151 = memref.load %arg1[%c43] : memref<99xf32, #tpu.memory_space<smem>>
    %c92 = arith.constant 92 : index
    %152 = memref.load %arg1[%c92] : memref<99xf32, #tpu.memory_space<smem>>
    %153 = vector.extract_strided_slice %89 {offsets = [0, 6, 0], sizes = [1, 16, 16], strides = [1, 1, 1]} : vector<1x22x16xf32> to vector<1x16x16xf32>
    %154 = vector.extract_strided_slice %90 {offsets = [0, 6, 0], sizes = [1, 16, 16], strides = [1, 1, 1]} : vector<1x22x16xf32> to vector<1x16x16xf32>
    %155 = vector.broadcast %151 : f32 to vector<1x16x16xf32>
    %156 = arith.mulf %155, %153 : vector<1x16x16xf32>
    %157 = arith.addf %147, %156 : vector<1x16x16xf32>
    %158 = vector.broadcast %152 : f32 to vector<1x16x16xf32>
    %159 = arith.mulf %158, %154 : vector<1x16x16xf32>
    %160 = arith.addf %150, %159 : vector<1x16x16xf32>
    %c0_34 = arith.constant 0 : index
    %c0_35 = arith.constant 0 : index
    %c2 = arith.constant 2 : index
    %161 = vector.load %arg4[%c0_34, %c0_35, %c2] : memref<1x24x128xf32, #tpu.memory_space<vmem>>, vector<1x22x16xf32>
    %c0_36 = arith.constant 0 : index
    %c0_37 = arith.constant 0 : index
    %c2_38 = arith.constant 2 : index
    %162 = vector.load %arg5[%c0_36, %c0_37, %c2_38] : memref<1x24x128xf32, #tpu.memory_space<vmem>>, vector<1x22x16xf32>
    %c2_39 = arith.constant 2 : index
    %163 = memref.load %arg1[%c2_39] : memref<99xf32, #tpu.memory_space<smem>>
    %c51 = arith.constant 51 : index
    %164 = memref.load %arg1[%c51] : memref<99xf32, #tpu.memory_space<smem>>
    %165 = vector.extract_strided_slice %161 {offsets = [0, 0, 0], sizes = [1, 16, 16], strides = [1, 1, 1]} : vector<1x22x16xf32> to vector<1x16x16xf32>
    %166 = vector.extract_strided_slice %162 {offsets = [0, 0, 0], sizes = [1, 16, 16], strides = [1, 1, 1]} : vector<1x22x16xf32> to vector<1x16x16xf32>
    %167 = vector.broadcast %163 : f32 to vector<1x16x16xf32>
    %168 = arith.mulf %167, %165 : vector<1x16x16xf32>
    %169 = arith.addf %85, %168 : vector<1x16x16xf32>
    %170 = vector.broadcast %164 : f32 to vector<1x16x16xf32>
    %171 = arith.mulf %170, %166 : vector<1x16x16xf32>
    %172 = arith.addf %88, %171 : vector<1x16x16xf32>
    %c9 = arith.constant 9 : index
    %173 = memref.load %arg1[%c9] : memref<99xf32, #tpu.memory_space<smem>>
    %c58 = arith.constant 58 : index
    %174 = memref.load %arg1[%c58] : memref<99xf32, #tpu.memory_space<smem>>
    %175 = vector.extract_strided_slice %161 {offsets = [0, 1, 0], sizes = [1, 16, 16], strides = [1, 1, 1]} : vector<1x22x16xf32> to vector<1x16x16xf32>
    %176 = vector.extract_strided_slice %162 {offsets = [0, 1, 0], sizes = [1, 16, 16], strides = [1, 1, 1]} : vector<1x22x16xf32> to vector<1x16x16xf32>
    %177 = vector.broadcast %173 : f32 to vector<1x16x16xf32>
    %178 = arith.mulf %177, %175 : vector<1x16x16xf32>
    %179 = arith.addf %169, %178 : vector<1x16x16xf32>
    %180 = vector.broadcast %174 : f32 to vector<1x16x16xf32>
    %181 = arith.mulf %180, %176 : vector<1x16x16xf32>
    %182 = arith.addf %172, %181 : vector<1x16x16xf32>
    %c16 = arith.constant 16 : index
    %183 = memref.load %arg1[%c16] : memref<99xf32, #tpu.memory_space<smem>>
    %c65 = arith.constant 65 : index
    %184 = memref.load %arg1[%c65] : memref<99xf32, #tpu.memory_space<smem>>
    %185 = vector.extract_strided_slice %161 {offsets = [0, 2, 0], sizes = [1, 16, 16], strides = [1, 1, 1]} : vector<1x22x16xf32> to vector<1x16x16xf32>
    %186 = vector.extract_strided_slice %162 {offsets = [0, 2, 0], sizes = [1, 16, 16], strides = [1, 1, 1]} : vector<1x22x16xf32> to vector<1x16x16xf32>
    %187 = vector.broadcast %183 : f32 to vector<1x16x16xf32>
    %188 = arith.mulf %187, %185 : vector<1x16x16xf32>
    %189 = arith.addf %179, %188 : vector<1x16x16xf32>
    %190 = vector.broadcast %184 : f32 to vector<1x16x16xf32>
    %191 = arith.mulf %190, %186 : vector<1x16x16xf32>
    %192 = arith.addf %182, %191 : vector<1x16x16xf32>
    %c23 = arith.constant 23 : index
    %193 = memref.load %arg1[%c23] : memref<99xf32, #tpu.memory_space<smem>>
    %c72 = arith.constant 72 : index
    %194 = memref.load %arg1[%c72] : memref<99xf32, #tpu.memory_space<smem>>
    %195 = vector.extract_strided_slice %161 {offsets = [0, 3, 0], sizes = [1, 16, 16], strides = [1, 1, 1]} : vector<1x22x16xf32> to vector<1x16x16xf32>
    %196 = vector.extract_strided_slice %162 {offsets = [0, 3, 0], sizes = [1, 16, 16], strides = [1, 1, 1]} : vector<1x22x16xf32> to vector<1x16x16xf32>
    %197 = vector.broadcast %193 : f32 to vector<1x16x16xf32>
    %198 = arith.mulf %197, %195 : vector<1x16x16xf32>
    %199 = arith.addf %189, %198 : vector<1x16x16xf32>
    %200 = vector.broadcast %194 : f32 to vector<1x16x16xf32>
    %201 = arith.mulf %200, %196 : vector<1x16x16xf32>
    %202 = arith.addf %192, %201 : vector<1x16x16xf32>
    %c30 = arith.constant 30 : index
    %203 = memref.load %arg1[%c30] : memref<99xf32, #tpu.memory_space<smem>>
    %c79 = arith.constant 79 : index
    %204 = memref.load %arg1[%c79] : memref<99xf32, #tpu.memory_space<smem>>
    %205 = vector.extract_strided_slice %161 {offsets = [0, 4, 0], sizes = [1, 16, 16], strides = [1, 1, 1]} : vector<1x22x16xf32> to vector<1x16x16xf32>
    %206 = vector.extract_strided_slice %162 {offsets = [0, 4, 0], sizes = [1, 16, 16], strides = [1, 1, 1]} : vector<1x22x16xf32> to vector<1x16x16xf32>
    %207 = vector.broadcast %203 : f32 to vector<1x16x16xf32>
    %208 = arith.mulf %207, %205 : vector<1x16x16xf32>
    %209 = arith.addf %199, %208 : vector<1x16x16xf32>
    %210 = vector.broadcast %204 : f32 to vector<1x16x16xf32>
    %211 = arith.mulf %210, %206 : vector<1x16x16xf32>
    %212 = arith.addf %202, %211 : vector<1x16x16xf32>
    %c37 = arith.constant 37 : index
    %213 = memref.load %arg1[%c37] : memref<99xf32, #tpu.memory_space<smem>>
    %c86 = arith.constant 86 : index
    %214 = memref.load %arg1[%c86] : memref<99xf32, #tpu.memory_space<smem>>
    %215 = vector.extract_strided_slice %161 {offsets = [0, 5, 0], sizes = [1, 16, 16], strides = [1, 1, 1]} : vector<1x22x16xf32> to vector<1x16x16xf32>
    %216 = vector.extract_strided_slice %162 {offsets = [0, 5, 0], sizes = [1, 16, 16], strides = [1, 1, 1]} : vector<1x22x16xf32> to vector<1x16x16xf32>
    %217 = vector.broadcast %213 : f32 to vector<1x16x16xf32>
    %218 = arith.mulf %217, %215 : vector<1x16x16xf32>
    %219 = arith.addf %209, %218 : vector<1x16x16xf32>
    %220 = vector.broadcast %214 : f32 to vector<1x16x16xf32>
    %221 = arith.mulf %220, %216 : vector<1x16x16xf32>
    %222 = arith.addf %212, %221 : vector<1x16x16xf32>
    %c44 = arith.constant 44 : index
    %223 = memref.load %arg1[%c44] : memref<99xf32, #tpu.memory_space<smem>>
    %c93 = arith.constant 93 : index
    %224 = memref.load %arg1[%c93] : memref<99xf32, #tpu.memory_space<smem>>
    %225 = vector.extract_strided_slice %161 {offsets = [0, 6, 0], sizes = [1, 16, 16], strides = [1, 1, 1]} : vector<1x22x16xf32> to vector<1x16x16xf32>
    %226 = vector.extract_strided_slice %162 {offsets = [0, 6, 0], sizes = [1, 16, 16], strides = [1, 1, 1]} : vector<1x22x16xf32> to vector<1x16x16xf32>
    %227 = vector.broadcast %223 : f32 to vector<1x16x16xf32>
    %228 = arith.mulf %227, %225 : vector<1x16x16xf32>
    %229 = arith.addf %219, %228 : vector<1x16x16xf32>
    %230 = vector.broadcast %224 : f32 to vector<1x16x16xf32>
    %231 = arith.mulf %230, %226 : vector<1x16x16xf32>
    %232 = arith.addf %222, %231 : vector<1x16x16xf32>
    %c0_40 = arith.constant 0 : index
    %c0_41 = arith.constant 0 : index
    %c3_42 = arith.constant 3 : index
    %233 = vector.load %arg4[%c0_40, %c0_41, %c3_42] : memref<1x24x128xf32, #tpu.memory_space<vmem>>, vector<1x22x16xf32>
    %c0_43 = arith.constant 0 : index
    %c0_44 = arith.constant 0 : index
    %c3_45 = arith.constant 3 : index
    %234 = vector.load %arg5[%c0_43, %c0_44, %c3_45] : memref<1x24x128xf32, #tpu.memory_space<vmem>>, vector<1x22x16xf32>
    %c3_46 = arith.constant 3 : index
    %235 = memref.load %arg1[%c3_46] : memref<99xf32, #tpu.memory_space<smem>>
    %c52 = arith.constant 52 : index
    %236 = memref.load %arg1[%c52] : memref<99xf32, #tpu.memory_space<smem>>
    %237 = vector.extract_strided_slice %233 {offsets = [0, 0, 0], sizes = [1, 16, 16], strides = [1, 1, 1]} : vector<1x22x16xf32> to vector<1x16x16xf32>
    %238 = vector.extract_strided_slice %234 {offsets = [0, 0, 0], sizes = [1, 16, 16], strides = [1, 1, 1]} : vector<1x22x16xf32> to vector<1x16x16xf32>
    %239 = vector.broadcast %235 : f32 to vector<1x16x16xf32>
    %240 = arith.mulf %239, %237 : vector<1x16x16xf32>
    %241 = arith.addf %157, %240 : vector<1x16x16xf32>
    %242 = vector.broadcast %236 : f32 to vector<1x16x16xf32>
    %243 = arith.mulf %242, %238 : vector<1x16x16xf32>
    %244 = arith.addf %160, %243 : vector<1x16x16xf32>
    %c10 = arith.constant 10 : index
    %245 = memref.load %arg1[%c10] : memref<99xf32, #tpu.memory_space<smem>>
    %c59 = arith.constant 59 : index
    %246 = memref.load %arg1[%c59] : memref<99xf32, #tpu.memory_space<smem>>
    %247 = vector.extract_strided_slice %233 {offsets = [0, 1, 0], sizes = [1, 16, 16], strides = [1, 1, 1]} : vector<1x22x16xf32> to vector<1x16x16xf32>
    %248 = vector.extract_strided_slice %234 {offsets = [0, 1, 0], sizes = [1, 16, 16], strides = [1, 1, 1]} : vector<1x22x16xf32> to vector<1x16x16xf32>
    %249 = vector.broadcast %245 : f32 to vector<1x16x16xf32>
    %250 = arith.mulf %249, %247 : vector<1x16x16xf32>
    %251 = arith.addf %241, %250 : vector<1x16x16xf32>
    %252 = vector.broadcast %246 : f32 to vector<1x16x16xf32>
    %253 = arith.mulf %252, %248 : vector<1x16x16xf32>
    %254 = arith.addf %244, %253 : vector<1x16x16xf32>
    %c17 = arith.constant 17 : index
    %255 = memref.load %arg1[%c17] : memref<99xf32, #tpu.memory_space<smem>>
    %c66 = arith.constant 66 : index
    %256 = memref.load %arg1[%c66] : memref<99xf32, #tpu.memory_space<smem>>
    %257 = vector.extract_strided_slice %233 {offsets = [0, 2, 0], sizes = [1, 16, 16], strides = [1, 1, 1]} : vector<1x22x16xf32> to vector<1x16x16xf32>
    %258 = vector.extract_strided_slice %234 {offsets = [0, 2, 0], sizes = [1, 16, 16], strides = [1, 1, 1]} : vector<1x22x16xf32> to vector<1x16x16xf32>
    %259 = vector.broadcast %255 : f32 to vector<1x16x16xf32>
    %260 = arith.mulf %259, %257 : vector<1x16x16xf32>
    %261 = arith.addf %251, %260 : vector<1x16x16xf32>
    %262 = vector.broadcast %256 : f32 to vector<1x16x16xf32>
    %263 = arith.mulf %262, %258 : vector<1x16x16xf32>
    %264 = arith.addf %254, %263 : vector<1x16x16xf32>
    %c24 = arith.constant 24 : index
    %265 = memref.load %arg1[%c24] : memref<99xf32, #tpu.memory_space<smem>>
    %c73 = arith.constant 73 : index
    %266 = memref.load %arg1[%c73] : memref<99xf32, #tpu.memory_space<smem>>
    %267 = vector.extract_strided_slice %233 {offsets = [0, 3, 0], sizes = [1, 16, 16], strides = [1, 1, 1]} : vector<1x22x16xf32> to vector<1x16x16xf32>
    %268 = vector.extract_strided_slice %234 {offsets = [0, 3, 0], sizes = [1, 16, 16], strides = [1, 1, 1]} : vector<1x22x16xf32> to vector<1x16x16xf32>
    %269 = vector.broadcast %265 : f32 to vector<1x16x16xf32>
    %270 = arith.mulf %269, %267 : vector<1x16x16xf32>
    %271 = arith.addf %261, %270 : vector<1x16x16xf32>
    %272 = vector.broadcast %266 : f32 to vector<1x16x16xf32>
    %273 = arith.mulf %272, %268 : vector<1x16x16xf32>
    %274 = arith.addf %264, %273 : vector<1x16x16xf32>
    %c31 = arith.constant 31 : index
    %275 = memref.load %arg1[%c31] : memref<99xf32, #tpu.memory_space<smem>>
    %c80 = arith.constant 80 : index
    %276 = memref.load %arg1[%c80] : memref<99xf32, #tpu.memory_space<smem>>
    %277 = vector.extract_strided_slice %233 {offsets = [0, 4, 0], sizes = [1, 16, 16], strides = [1, 1, 1]} : vector<1x22x16xf32> to vector<1x16x16xf32>
    %278 = vector.extract_strided_slice %234 {offsets = [0, 4, 0], sizes = [1, 16, 16], strides = [1, 1, 1]} : vector<1x22x16xf32> to vector<1x16x16xf32>
    %279 = vector.broadcast %275 : f32 to vector<1x16x16xf32>
    %280 = arith.mulf %279, %277 : vector<1x16x16xf32>
    %281 = arith.addf %271, %280 : vector<1x16x16xf32>
    %282 = vector.broadcast %276 : f32 to vector<1x16x16xf32>
    %283 = arith.mulf %282, %278 : vector<1x16x16xf32>
    %284 = arith.addf %274, %283 : vector<1x16x16xf32>
    %c38 = arith.constant 38 : index
    %285 = memref.load %arg1[%c38] : memref<99xf32, #tpu.memory_space<smem>>
    %c87 = arith.constant 87 : index
    %286 = memref.load %arg1[%c87] : memref<99xf32, #tpu.memory_space<smem>>
    %287 = vector.extract_strided_slice %233 {offsets = [0, 5, 0], sizes = [1, 16, 16], strides = [1, 1, 1]} : vector<1x22x16xf32> to vector<1x16x16xf32>
    %288 = vector.extract_strided_slice %234 {offsets = [0, 5, 0], sizes = [1, 16, 16], strides = [1, 1, 1]} : vector<1x22x16xf32> to vector<1x16x16xf32>
    %289 = vector.broadcast %285 : f32 to vector<1x16x16xf32>
    %290 = arith.mulf %289, %287 : vector<1x16x16xf32>
    %291 = arith.addf %281, %290 : vector<1x16x16xf32>
    %292 = vector.broadcast %286 : f32 to vector<1x16x16xf32>
    %293 = arith.mulf %292, %288 : vector<1x16x16xf32>
    %294 = arith.addf %284, %293 : vector<1x16x16xf32>
    %c45 = arith.constant 45 : index
    %295 = memref.load %arg1[%c45] : memref<99xf32, #tpu.memory_space<smem>>
    %c94 = arith.constant 94 : index
    %296 = memref.load %arg1[%c94] : memref<99xf32, #tpu.memory_space<smem>>
    %297 = vector.extract_strided_slice %233 {offsets = [0, 6, 0], sizes = [1, 16, 16], strides = [1, 1, 1]} : vector<1x22x16xf32> to vector<1x16x16xf32>
    %298 = vector.extract_strided_slice %234 {offsets = [0, 6, 0], sizes = [1, 16, 16], strides = [1, 1, 1]} : vector<1x22x16xf32> to vector<1x16x16xf32>
    %299 = vector.broadcast %295 : f32 to vector<1x16x16xf32>
    %300 = arith.mulf %299, %297 : vector<1x16x16xf32>
    %301 = arith.addf %291, %300 : vector<1x16x16xf32>
    %302 = vector.broadcast %296 : f32 to vector<1x16x16xf32>
    %303 = arith.mulf %302, %298 : vector<1x16x16xf32>
    %304 = arith.addf %294, %303 : vector<1x16x16xf32>
    %c0_47 = arith.constant 0 : index
    %c0_48 = arith.constant 0 : index
    %c4 = arith.constant 4 : index
    %305 = vector.load %arg4[%c0_47, %c0_48, %c4] : memref<1x24x128xf32, #tpu.memory_space<vmem>>, vector<1x22x16xf32>
    %c0_49 = arith.constant 0 : index
    %c0_50 = arith.constant 0 : index
    %c4_51 = arith.constant 4 : index
    %306 = vector.load %arg5[%c0_49, %c0_50, %c4_51] : memref<1x24x128xf32, #tpu.memory_space<vmem>>, vector<1x22x16xf32>
    %c4_52 = arith.constant 4 : index
    %307 = memref.load %arg1[%c4_52] : memref<99xf32, #tpu.memory_space<smem>>
    %c53 = arith.constant 53 : index
    %308 = memref.load %arg1[%c53] : memref<99xf32, #tpu.memory_space<smem>>
    %309 = vector.extract_strided_slice %305 {offsets = [0, 0, 0], sizes = [1, 16, 16], strides = [1, 1, 1]} : vector<1x22x16xf32> to vector<1x16x16xf32>
    %310 = vector.extract_strided_slice %306 {offsets = [0, 0, 0], sizes = [1, 16, 16], strides = [1, 1, 1]} : vector<1x22x16xf32> to vector<1x16x16xf32>
    %311 = vector.broadcast %307 : f32 to vector<1x16x16xf32>
    %312 = arith.mulf %311, %309 : vector<1x16x16xf32>
    %313 = arith.addf %229, %312 : vector<1x16x16xf32>
    %314 = vector.broadcast %308 : f32 to vector<1x16x16xf32>
    %315 = arith.mulf %314, %310 : vector<1x16x16xf32>
    %316 = arith.addf %232, %315 : vector<1x16x16xf32>
    %c11 = arith.constant 11 : index
    %317 = memref.load %arg1[%c11] : memref<99xf32, #tpu.memory_space<smem>>
    %c60 = arith.constant 60 : index
    %318 = memref.load %arg1[%c60] : memref<99xf32, #tpu.memory_space<smem>>
    %319 = vector.extract_strided_slice %305 {offsets = [0, 1, 0], sizes = [1, 16, 16], strides = [1, 1, 1]} : vector<1x22x16xf32> to vector<1x16x16xf32>
    %320 = vector.extract_strided_slice %306 {offsets = [0, 1, 0], sizes = [1, 16, 16], strides = [1, 1, 1]} : vector<1x22x16xf32> to vector<1x16x16xf32>
    %321 = vector.broadcast %317 : f32 to vector<1x16x16xf32>
    %322 = arith.mulf %321, %319 : vector<1x16x16xf32>
    %323 = arith.addf %313, %322 : vector<1x16x16xf32>
    %324 = vector.broadcast %318 : f32 to vector<1x16x16xf32>
    %325 = arith.mulf %324, %320 : vector<1x16x16xf32>
    %326 = arith.addf %316, %325 : vector<1x16x16xf32>
    %c18 = arith.constant 18 : index
    %327 = memref.load %arg1[%c18] : memref<99xf32, #tpu.memory_space<smem>>
    %c67 = arith.constant 67 : index
    %328 = memref.load %arg1[%c67] : memref<99xf32, #tpu.memory_space<smem>>
    %329 = vector.extract_strided_slice %305 {offsets = [0, 2, 0], sizes = [1, 16, 16], strides = [1, 1, 1]} : vector<1x22x16xf32> to vector<1x16x16xf32>
    %330 = vector.extract_strided_slice %306 {offsets = [0, 2, 0], sizes = [1, 16, 16], strides = [1, 1, 1]} : vector<1x22x16xf32> to vector<1x16x16xf32>
    %331 = vector.broadcast %327 : f32 to vector<1x16x16xf32>
    %332 = arith.mulf %331, %329 : vector<1x16x16xf32>
    %333 = arith.addf %323, %332 : vector<1x16x16xf32>
    %334 = vector.broadcast %328 : f32 to vector<1x16x16xf32>
    %335 = arith.mulf %334, %330 : vector<1x16x16xf32>
    %336 = arith.addf %326, %335 : vector<1x16x16xf32>
    %c25 = arith.constant 25 : index
    %337 = memref.load %arg1[%c25] : memref<99xf32, #tpu.memory_space<smem>>
    %c74 = arith.constant 74 : index
    %338 = memref.load %arg1[%c74] : memref<99xf32, #tpu.memory_space<smem>>
    %339 = vector.extract_strided_slice %305 {offsets = [0, 3, 0], sizes = [1, 16, 16], strides = [1, 1, 1]} : vector<1x22x16xf32> to vector<1x16x16xf32>
    %340 = vector.extract_strided_slice %306 {offsets = [0, 3, 0], sizes = [1, 16, 16], strides = [1, 1, 1]} : vector<1x22x16xf32> to vector<1x16x16xf32>
    %341 = vector.broadcast %337 : f32 to vector<1x16x16xf32>
    %342 = arith.mulf %341, %339 : vector<1x16x16xf32>
    %343 = arith.addf %333, %342 : vector<1x16x16xf32>
    %344 = vector.broadcast %338 : f32 to vector<1x16x16xf32>
    %345 = arith.mulf %344, %340 : vector<1x16x16xf32>
    %346 = arith.addf %336, %345 : vector<1x16x16xf32>
    %c32 = arith.constant 32 : index
    %347 = memref.load %arg1[%c32] : memref<99xf32, #tpu.memory_space<smem>>
    %c81 = arith.constant 81 : index
    %348 = memref.load %arg1[%c81] : memref<99xf32, #tpu.memory_space<smem>>
    %349 = vector.extract_strided_slice %305 {offsets = [0, 4, 0], sizes = [1, 16, 16], strides = [1, 1, 1]} : vector<1x22x16xf32> to vector<1x16x16xf32>
    %350 = vector.extract_strided_slice %306 {offsets = [0, 4, 0], sizes = [1, 16, 16], strides = [1, 1, 1]} : vector<1x22x16xf32> to vector<1x16x16xf32>
    %351 = vector.broadcast %347 : f32 to vector<1x16x16xf32>
    %352 = arith.mulf %351, %349 : vector<1x16x16xf32>
    %353 = arith.addf %343, %352 : vector<1x16x16xf32>
    %354 = vector.broadcast %348 : f32 to vector<1x16x16xf32>
    %355 = arith.mulf %354, %350 : vector<1x16x16xf32>
    %356 = arith.addf %346, %355 : vector<1x16x16xf32>
    %c39 = arith.constant 39 : index
    %357 = memref.load %arg1[%c39] : memref<99xf32, #tpu.memory_space<smem>>
    %c88 = arith.constant 88 : index
    %358 = memref.load %arg1[%c88] : memref<99xf32, #tpu.memory_space<smem>>
    %359 = vector.extract_strided_slice %305 {offsets = [0, 5, 0], sizes = [1, 16, 16], strides = [1, 1, 1]} : vector<1x22x16xf32> to vector<1x16x16xf32>
    %360 = vector.extract_strided_slice %306 {offsets = [0, 5, 0], sizes = [1, 16, 16], strides = [1, 1, 1]} : vector<1x22x16xf32> to vector<1x16x16xf32>
    %361 = vector.broadcast %357 : f32 to vector<1x16x16xf32>
    %362 = arith.mulf %361, %359 : vector<1x16x16xf32>
    %363 = arith.addf %353, %362 : vector<1x16x16xf32>
    %364 = vector.broadcast %358 : f32 to vector<1x16x16xf32>
    %365 = arith.mulf %364, %360 : vector<1x16x16xf32>
    %366 = arith.addf %356, %365 : vector<1x16x16xf32>
    %c46 = arith.constant 46 : index
    %367 = memref.load %arg1[%c46] : memref<99xf32, #tpu.memory_space<smem>>
    %c95 = arith.constant 95 : index
    %368 = memref.load %arg1[%c95] : memref<99xf32, #tpu.memory_space<smem>>
    %369 = vector.extract_strided_slice %305 {offsets = [0, 6, 0], sizes = [1, 16, 16], strides = [1, 1, 1]} : vector<1x22x16xf32> to vector<1x16x16xf32>
    %370 = vector.extract_strided_slice %306 {offsets = [0, 6, 0], sizes = [1, 16, 16], strides = [1, 1, 1]} : vector<1x22x16xf32> to vector<1x16x16xf32>
    %371 = vector.broadcast %367 : f32 to vector<1x16x16xf32>
    %372 = arith.mulf %371, %369 : vector<1x16x16xf32>
    %373 = arith.addf %363, %372 : vector<1x16x16xf32>
    %374 = vector.broadcast %368 : f32 to vector<1x16x16xf32>
    %375 = arith.mulf %374, %370 : vector<1x16x16xf32>
    %376 = arith.addf %366, %375 : vector<1x16x16xf32>
    %c0_53 = arith.constant 0 : index
    %c0_54 = arith.constant 0 : index
    %c5 = arith.constant 5 : index
    %377 = vector.load %arg4[%c0_53, %c0_54, %c5] : memref<1x24x128xf32, #tpu.memory_space<vmem>>, vector<1x22x16xf32>
    %c0_55 = arith.constant 0 : index
    %c0_56 = arith.constant 0 : index
    %c5_57 = arith.constant 5 : index
    %378 = vector.load %arg5[%c0_55, %c0_56, %c5_57] : memref<1x24x128xf32, #tpu.memory_space<vmem>>, vector<1x22x16xf32>
    %c5_58 = arith.constant 5 : index
    %379 = memref.load %arg1[%c5_58] : memref<99xf32, #tpu.memory_space<smem>>
    %c54 = arith.constant 54 : index
    %380 = memref.load %arg1[%c54] : memref<99xf32, #tpu.memory_space<smem>>
    %381 = vector.extract_strided_slice %377 {offsets = [0, 0, 0], sizes = [1, 16, 16], strides = [1, 1, 1]} : vector<1x22x16xf32> to vector<1x16x16xf32>
    %382 = vector.extract_strided_slice %378 {offsets = [0, 0, 0], sizes = [1, 16, 16], strides = [1, 1, 1]} : vector<1x22x16xf32> to vector<1x16x16xf32>
    %383 = vector.broadcast %379 : f32 to vector<1x16x16xf32>
    %384 = arith.mulf %383, %381 : vector<1x16x16xf32>
    %385 = arith.addf %301, %384 : vector<1x16x16xf32>
    %386 = vector.broadcast %380 : f32 to vector<1x16x16xf32>
    %387 = arith.mulf %386, %382 : vector<1x16x16xf32>
    %388 = arith.addf %304, %387 : vector<1x16x16xf32>
    %c12 = arith.constant 12 : index
    %389 = memref.load %arg1[%c12] : memref<99xf32, #tpu.memory_space<smem>>
    %c61 = arith.constant 61 : index
    %390 = memref.load %arg1[%c61] : memref<99xf32, #tpu.memory_space<smem>>
    %391 = vector.extract_strided_slice %377 {offsets = [0, 1, 0], sizes = [1, 16, 16], strides = [1, 1, 1]} : vector<1x22x16xf32> to vector<1x16x16xf32>
    %392 = vector.extract_strided_slice %378 {offsets = [0, 1, 0], sizes = [1, 16, 16], strides = [1, 1, 1]} : vector<1x22x16xf32> to vector<1x16x16xf32>
    %393 = vector.broadcast %389 : f32 to vector<1x16x16xf32>
    %394 = arith.mulf %393, %391 : vector<1x16x16xf32>
    %395 = arith.addf %385, %394 : vector<1x16x16xf32>
    %396 = vector.broadcast %390 : f32 to vector<1x16x16xf32>
    %397 = arith.mulf %396, %392 : vector<1x16x16xf32>
    %398 = arith.addf %388, %397 : vector<1x16x16xf32>
    %c19 = arith.constant 19 : index
    %399 = memref.load %arg1[%c19] : memref<99xf32, #tpu.memory_space<smem>>
    %c68 = arith.constant 68 : index
    %400 = memref.load %arg1[%c68] : memref<99xf32, #tpu.memory_space<smem>>
    %401 = vector.extract_strided_slice %377 {offsets = [0, 2, 0], sizes = [1, 16, 16], strides = [1, 1, 1]} : vector<1x22x16xf32> to vector<1x16x16xf32>
    %402 = vector.extract_strided_slice %378 {offsets = [0, 2, 0], sizes = [1, 16, 16], strides = [1, 1, 1]} : vector<1x22x16xf32> to vector<1x16x16xf32>
    %403 = vector.broadcast %399 : f32 to vector<1x16x16xf32>
    %404 = arith.mulf %403, %401 : vector<1x16x16xf32>
    %405 = arith.addf %395, %404 : vector<1x16x16xf32>
    %406 = vector.broadcast %400 : f32 to vector<1x16x16xf32>
    %407 = arith.mulf %406, %402 : vector<1x16x16xf32>
    %408 = arith.addf %398, %407 : vector<1x16x16xf32>
    %c26 = arith.constant 26 : index
    %409 = memref.load %arg1[%c26] : memref<99xf32, #tpu.memory_space<smem>>
    %c75 = arith.constant 75 : index
    %410 = memref.load %arg1[%c75] : memref<99xf32, #tpu.memory_space<smem>>
    %411 = vector.extract_strided_slice %377 {offsets = [0, 3, 0], sizes = [1, 16, 16], strides = [1, 1, 1]} : vector<1x22x16xf32> to vector<1x16x16xf32>
    %412 = vector.extract_strided_slice %378 {offsets = [0, 3, 0], sizes = [1, 16, 16], strides = [1, 1, 1]} : vector<1x22x16xf32> to vector<1x16x16xf32>
    %413 = vector.broadcast %409 : f32 to vector<1x16x16xf32>
    %414 = arith.mulf %413, %411 : vector<1x16x16xf32>
    %415 = arith.addf %405, %414 : vector<1x16x16xf32>
    %416 = vector.broadcast %410 : f32 to vector<1x16x16xf32>
    %417 = arith.mulf %416, %412 : vector<1x16x16xf32>
    %418 = arith.addf %408, %417 : vector<1x16x16xf32>
    %c33 = arith.constant 33 : index
    %419 = memref.load %arg1[%c33] : memref<99xf32, #tpu.memory_space<smem>>
    %c82 = arith.constant 82 : index
    %420 = memref.load %arg1[%c82] : memref<99xf32, #tpu.memory_space<smem>>
    %421 = vector.extract_strided_slice %377 {offsets = [0, 4, 0], sizes = [1, 16, 16], strides = [1, 1, 1]} : vector<1x22x16xf32> to vector<1x16x16xf32>
    %422 = vector.extract_strided_slice %378 {offsets = [0, 4, 0], sizes = [1, 16, 16], strides = [1, 1, 1]} : vector<1x22x16xf32> to vector<1x16x16xf32>
    %423 = vector.broadcast %419 : f32 to vector<1x16x16xf32>
    %424 = arith.mulf %423, %421 : vector<1x16x16xf32>
    %425 = arith.addf %415, %424 : vector<1x16x16xf32>
    %426 = vector.broadcast %420 : f32 to vector<1x16x16xf32>
    %427 = arith.mulf %426, %422 : vector<1x16x16xf32>
    %428 = arith.addf %418, %427 : vector<1x16x16xf32>
    %c40 = arith.constant 40 : index
    %429 = memref.load %arg1[%c40] : memref<99xf32, #tpu.memory_space<smem>>
    %c89 = arith.constant 89 : index
    %430 = memref.load %arg1[%c89] : memref<99xf32, #tpu.memory_space<smem>>
    %431 = vector.extract_strided_slice %377 {offsets = [0, 5, 0], sizes = [1, 16, 16], strides = [1, 1, 1]} : vector<1x22x16xf32> to vector<1x16x16xf32>
    %432 = vector.extract_strided_slice %378 {offsets = [0, 5, 0], sizes = [1, 16, 16], strides = [1, 1, 1]} : vector<1x22x16xf32> to vector<1x16x16xf32>
    %433 = vector.broadcast %429 : f32 to vector<1x16x16xf32>
    %434 = arith.mulf %433, %431 : vector<1x16x16xf32>
    %435 = arith.addf %425, %434 : vector<1x16x16xf32>
    %436 = vector.broadcast %430 : f32 to vector<1x16x16xf32>
    %437 = arith.mulf %436, %432 : vector<1x16x16xf32>
    %438 = arith.addf %428, %437 : vector<1x16x16xf32>
    %c47 = arith.constant 47 : index
    %439 = memref.load %arg1[%c47] : memref<99xf32, #tpu.memory_space<smem>>
    %c96 = arith.constant 96 : index
    %440 = memref.load %arg1[%c96] : memref<99xf32, #tpu.memory_space<smem>>
    %441 = vector.extract_strided_slice %377 {offsets = [0, 6, 0], sizes = [1, 16, 16], strides = [1, 1, 1]} : vector<1x22x16xf32> to vector<1x16x16xf32>
    %442 = vector.extract_strided_slice %378 {offsets = [0, 6, 0], sizes = [1, 16, 16], strides = [1, 1, 1]} : vector<1x22x16xf32> to vector<1x16x16xf32>
    %443 = vector.broadcast %439 : f32 to vector<1x16x16xf32>
    %444 = arith.mulf %443, %441 : vector<1x16x16xf32>
    %445 = arith.addf %435, %444 : vector<1x16x16xf32>
    %446 = vector.broadcast %440 : f32 to vector<1x16x16xf32>
    %447 = arith.mulf %446, %442 : vector<1x16x16xf32>
    %448 = arith.addf %438, %447 : vector<1x16x16xf32>
    %c0_59 = arith.constant 0 : index
    %c0_60 = arith.constant 0 : index
    %c6 = arith.constant 6 : index
    %449 = vector.load %arg4[%c0_59, %c0_60, %c6] : memref<1x24x128xf32, #tpu.memory_space<vmem>>, vector<1x22x16xf32>
    %c0_61 = arith.constant 0 : index
    %c0_62 = arith.constant 0 : index
    %c6_63 = arith.constant 6 : index
    %450 = vector.load %arg5[%c0_61, %c0_62, %c6_63] : memref<1x24x128xf32, #tpu.memory_space<vmem>>, vector<1x22x16xf32>
    %c6_64 = arith.constant 6 : index
    %451 = memref.load %arg1[%c6_64] : memref<99xf32, #tpu.memory_space<smem>>
    %c55 = arith.constant 55 : index
    %452 = memref.load %arg1[%c55] : memref<99xf32, #tpu.memory_space<smem>>
    %453 = vector.extract_strided_slice %449 {offsets = [0, 0, 0], sizes = [1, 16, 16], strides = [1, 1, 1]} : vector<1x22x16xf32> to vector<1x16x16xf32>
    %454 = vector.extract_strided_slice %450 {offsets = [0, 0, 0], sizes = [1, 16, 16], strides = [1, 1, 1]} : vector<1x22x16xf32> to vector<1x16x16xf32>
    %455 = vector.broadcast %451 : f32 to vector<1x16x16xf32>
    %456 = arith.mulf %455, %453 : vector<1x16x16xf32>
    %457 = arith.addf %373, %456 : vector<1x16x16xf32>
    %458 = vector.broadcast %452 : f32 to vector<1x16x16xf32>
    %459 = arith.mulf %458, %454 : vector<1x16x16xf32>
    %460 = arith.addf %376, %459 : vector<1x16x16xf32>
    %c13 = arith.constant 13 : index
    %461 = memref.load %arg1[%c13] : memref<99xf32, #tpu.memory_space<smem>>
    %c62 = arith.constant 62 : index
    %462 = memref.load %arg1[%c62] : memref<99xf32, #tpu.memory_space<smem>>
    %463 = vector.extract_strided_slice %449 {offsets = [0, 1, 0], sizes = [1, 16, 16], strides = [1, 1, 1]} : vector<1x22x16xf32> to vector<1x16x16xf32>
    %464 = vector.extract_strided_slice %450 {offsets = [0, 1, 0], sizes = [1, 16, 16], strides = [1, 1, 1]} : vector<1x22x16xf32> to vector<1x16x16xf32>
    %465 = vector.broadcast %461 : f32 to vector<1x16x16xf32>
    %466 = arith.mulf %465, %463 : vector<1x16x16xf32>
    %467 = arith.addf %457, %466 : vector<1x16x16xf32>
    %468 = vector.broadcast %462 : f32 to vector<1x16x16xf32>
    %469 = arith.mulf %468, %464 : vector<1x16x16xf32>
    %470 = arith.addf %460, %469 : vector<1x16x16xf32>
    %c20 = arith.constant 20 : index
    %471 = memref.load %arg1[%c20] : memref<99xf32, #tpu.memory_space<smem>>
    %c69 = arith.constant 69 : index
    %472 = memref.load %arg1[%c69] : memref<99xf32, #tpu.memory_space<smem>>
    %473 = vector.extract_strided_slice %449 {offsets = [0, 2, 0], sizes = [1, 16, 16], strides = [1, 1, 1]} : vector<1x22x16xf32> to vector<1x16x16xf32>
    %474 = vector.extract_strided_slice %450 {offsets = [0, 2, 0], sizes = [1, 16, 16], strides = [1, 1, 1]} : vector<1x22x16xf32> to vector<1x16x16xf32>
    %475 = vector.broadcast %471 : f32 to vector<1x16x16xf32>
    %476 = arith.mulf %475, %473 : vector<1x16x16xf32>
    %477 = arith.addf %467, %476 : vector<1x16x16xf32>
    %478 = vector.broadcast %472 : f32 to vector<1x16x16xf32>
    %479 = arith.mulf %478, %474 : vector<1x16x16xf32>
    %480 = arith.addf %470, %479 : vector<1x16x16xf32>
    %c27 = arith.constant 27 : index
    %481 = memref.load %arg1[%c27] : memref<99xf32, #tpu.memory_space<smem>>
    %c76 = arith.constant 76 : index
    %482 = memref.load %arg1[%c76] : memref<99xf32, #tpu.memory_space<smem>>
    %483 = vector.extract_strided_slice %449 {offsets = [0, 3, 0], sizes = [1, 16, 16], strides = [1, 1, 1]} : vector<1x22x16xf32> to vector<1x16x16xf32>
    %484 = vector.extract_strided_slice %450 {offsets = [0, 3, 0], sizes = [1, 16, 16], strides = [1, 1, 1]} : vector<1x22x16xf32> to vector<1x16x16xf32>
    %485 = vector.broadcast %481 : f32 to vector<1x16x16xf32>
    %486 = arith.mulf %485, %483 : vector<1x16x16xf32>
    %487 = arith.addf %477, %486 : vector<1x16x16xf32>
    %488 = vector.broadcast %482 : f32 to vector<1x16x16xf32>
    %489 = arith.mulf %488, %484 : vector<1x16x16xf32>
    %490 = arith.addf %480, %489 : vector<1x16x16xf32>
    %c34 = arith.constant 34 : index
    %491 = memref.load %arg1[%c34] : memref<99xf32, #tpu.memory_space<smem>>
    %c83 = arith.constant 83 : index
    %492 = memref.load %arg1[%c83] : memref<99xf32, #tpu.memory_space<smem>>
    %493 = vector.extract_strided_slice %449 {offsets = [0, 4, 0], sizes = [1, 16, 16], strides = [1, 1, 1]} : vector<1x22x16xf32> to vector<1x16x16xf32>
    %494 = vector.extract_strided_slice %450 {offsets = [0, 4, 0], sizes = [1, 16, 16], strides = [1, 1, 1]} : vector<1x22x16xf32> to vector<1x16x16xf32>
    %495 = vector.broadcast %491 : f32 to vector<1x16x16xf32>
    %496 = arith.mulf %495, %493 : vector<1x16x16xf32>
    %497 = arith.addf %487, %496 : vector<1x16x16xf32>
    %498 = vector.broadcast %492 : f32 to vector<1x16x16xf32>
    %499 = arith.mulf %498, %494 : vector<1x16x16xf32>
    %500 = arith.addf %490, %499 : vector<1x16x16xf32>
    %c41 = arith.constant 41 : index
    %501 = memref.load %arg1[%c41] : memref<99xf32, #tpu.memory_space<smem>>
    %c90 = arith.constant 90 : index
    %502 = memref.load %arg1[%c90] : memref<99xf32, #tpu.memory_space<smem>>
    %503 = vector.extract_strided_slice %449 {offsets = [0, 5, 0], sizes = [1, 16, 16], strides = [1, 1, 1]} : vector<1x22x16xf32> to vector<1x16x16xf32>
    %504 = vector.extract_strided_slice %450 {offsets = [0, 5, 0], sizes = [1, 16, 16], strides = [1, 1, 1]} : vector<1x22x16xf32> to vector<1x16x16xf32>
    %505 = vector.broadcast %501 : f32 to vector<1x16x16xf32>
    %506 = arith.mulf %505, %503 : vector<1x16x16xf32>
    %507 = arith.addf %497, %506 : vector<1x16x16xf32>
    %508 = vector.broadcast %502 : f32 to vector<1x16x16xf32>
    %509 = arith.mulf %508, %504 : vector<1x16x16xf32>
    %510 = arith.addf %500, %509 : vector<1x16x16xf32>
    %c48 = arith.constant 48 : index
    %511 = memref.load %arg1[%c48] : memref<99xf32, #tpu.memory_space<smem>>
    %c97 = arith.constant 97 : index
    %512 = memref.load %arg1[%c97] : memref<99xf32, #tpu.memory_space<smem>>
    %513 = vector.extract_strided_slice %449 {offsets = [0, 6, 0], sizes = [1, 16, 16], strides = [1, 1, 1]} : vector<1x22x16xf32> to vector<1x16x16xf32>
    %514 = vector.extract_strided_slice %450 {offsets = [0, 6, 0], sizes = [1, 16, 16], strides = [1, 1, 1]} : vector<1x22x16xf32> to vector<1x16x16xf32>
    %515 = vector.broadcast %511 : f32 to vector<1x16x16xf32>
    %516 = arith.mulf %515, %513 : vector<1x16x16xf32>
    %517 = arith.addf %507, %516 : vector<1x16x16xf32>
    %518 = vector.broadcast %512 : f32 to vector<1x16x16xf32>
    %519 = arith.mulf %518, %514 : vector<1x16x16xf32>
    %520 = arith.addf %510, %519 : vector<1x16x16xf32>
    %521 = arith.addf %517, %445 : vector<1x16x16xf32>
    %522 = arith.addf %520, %448 : vector<1x16x16xf32>
    %523 = arith.addf %521, %522 : vector<1x16x16xf32>
    %c98 = arith.constant 98 : index
    %524 = memref.load %arg1[%c98] : memref<99xf32, #tpu.memory_space<smem>>
    %525 = vector.broadcast %524 : f32 to vector<1x16x16xf32>
    %526 = arith.addf %523, %525 : vector<1x16x16xf32>
    %527 = arith.negf %526 : vector<1x16x16xf32>
    %528 = math.exp %527 : vector<1x16x16xf32>
    %cst_65 = arith.constant 1.000000e+00 : f32
    %529 = vector.broadcast %cst_65 : f32 to vector<1x16x16xf32>
    %530 = arith.addf %529, %528 : vector<1x16x16xf32>
    %531 = arith.divf %529, %530 : vector<1x16x16xf32>
    %532 = vector.shape_cast %531 : vector<1x16x16xf32> to vector<1x1x256xf32>
    %c0_66 = arith.constant 0 : index
    %c0_67 = arith.constant 0 : index
    %c0_68 = arith.constant 0 : index
    %533 = vector.load %arg2[%c0_66, %c0_67, %c0_68] : memref<1x4x256xf32, #tpu.memory_space<vmem>>, vector<1x4x256xf32>
    %534 = vector.broadcast %532 : vector<1x1x256xf32> to vector<1x4x256xf32>
    %535 = arith.mulf %533, %534 : vector<1x4x256xf32>
    %c0_69 = arith.constant 0 : index
    %c0_70 = arith.constant 0 : index
    %c0_71 = arith.constant 0 : index
    %536 = vector.load %arg3[%c0_69, %c0_70, %c0_71] : memref<1x4x256xf32, #tpu.memory_space<vmem>>, vector<1x4x256xf32>
    tpu.vector_store %arg3[%c0_69, %c0_70, %c0_71], %535 {strides = array<i32>} : memref<1x4x256xf32, #tpu.memory_space<vmem>>, vector<1x4x256xf32>,
    return
  }
  func.func @transform_0(%arg0: i32) -> i32 {
    %c0_i32 = arith.constant 0 : i32
    %c0_i32_0 = arith.constant 0 : i32
    return %c0_i32 : i32
  }
  func.func @transform_1(%arg0: i32) -> (i32, i32, i32) {
    %c0_i32 = arith.constant 0 : i32
    %c0_i32_0 = arith.constant 0 : i32
    %c0_i32_1 = arith.constant 0 : i32
    return %arg0, %c0_i32, %c0_i32_0 : i32, i32, i32
  }
  func.func @transform_2(%arg0: i32) -> (i32, i32, i32) {
    %c0_i32 = arith.constant 0 : i32
    %c0_i32_0 = arith.constant 0 : i32
    %c0_i32_1 = arith.constant 0 : i32
    return %arg0, %c0_i32, %c0_i32_0 : i32, i32, i32
  }
}

</mosaic_0001>

<llo_original>
// kernel: tpu_custom_call.1
$region0: #{tpu_custom_call.1}
  #allocation0 [shape = 'u32[]', space=smem, size = 0x4, offset = 0x4, fixed_abs, tag = 'smem constant byte address 0x4 - core index']
  #allocation1 [shape = 'u32[144,128]{1,0:T(1,128)}', space=vmem, size = 0x12000, scoped, tag = 'internal scratch']
  #allocation2 [shape = 'f32[1,24,128]{2,1,0:T(8,128)}', space=vmem, size = 0x3000, scoped, tag = 'scratch operand']
  #allocation3 [shape = 'f32[1,24,128]{2,1,0:T(8,128)}', space=vmem, size = 0x3000, scoped, tag = 'scratch operand']
  %s0 = inlined_call_operand.hbm [shape: f32[99], index: 0, kind: input, shape index: {}]
  %s1 = inlined_call_operand.hbm [shape: f32[2,4,256], index: 1, kind: input, shape index: {}]
  %s2 = inlined_call_operand.hbm [shape: f32[2,4,256], index: 2, kind: output, shape index: {}]
  %s3 = sld [smem:[#allocation0]]
  $region49: #{tpu_custom_call.1} parent=0
    _
  %s5 = ssub.s32 1, %s3
  %s6 = scalar_select 0, %s5, %s3
  $region1: #{tpu_custom_call.1} parent=0
    #allocation4 [shape = 'u8[512]{0}', space=smem, size = 0x200, scoped, tag = 'input window, operand 0, single buffered']
    #allocation5 [shape = 's32[2]{0}', space=sflag, size = 0x8, scoped, tag = 'scoped memory for tpu_custom_call.1']
    #allocation6 [shape = 's32[2]{0}', space=sflag, size = 0x8, scoped, tag = 'scoped memory for tpu_custom_call.1']
    #allocation7 [shape = 's32[2]{0}', space=sflag, size = 0x8, scoped, tag = 'scoped memory for tpu_custom_call.1']
    #allocation8 [shape = 'u8[8192]{0}', space=vmem, size = 0x2000, scoped, tag = 'input window, operand 1']
    #allocation9 [shape = 'u8[8192]{0}', space=vmem, size = 0x2000, scoped, tag = 'output window, operand 0']
    %7 = vsyncpa [#allocation7], 0
    %8 = vsyncpa [#allocation5], 0
    %s9 = scalar_lea.sflag [#allocation5], 1
    %10 = vsyncpa %s9, 0
    %11 = vsyncpa [#allocation6], 0
    %s12 = scalar_lea.sflag [#allocation6], 1
    %13 = vsyncpa %s12, 0
    loop: start=0, step=1, limit=4
    $region2: #{tpu_custom_call.1} parent=1 // loop_pre_header
      _
    $region3: #{tpu_custom_call.1} parent=1 // loop_header
      %s15 = sphi 0, %s19
      %p16 = scmp.ge.s32.totalorder %s15, 4
      %s23 = sphi 0, %s23
      %s25 = sphi 0, %s23
      %s26 = sphi 0, %s25
      %s40 = sphi 0, %s26
      %s46 = sphi 0, %s48
      %s49 = sphi 0, %s46
      %s50 = sphi 0, %s49
      %s66 = sphi 0, %s50
      %s72 = sphi 0, %s74
      %s75 = sphi 0, %s72
      %s76 = sphi 0, %s75
      %s92 = sphi 0, %s76
    $region4: #{tpu_custom_call.1} parent=1 // loop_header_branch
      %18 = sbr.rel (%p16) target = $region8
    $region5: #{tpu_custom_call.1} parent=1 // loop_body
      %s20 = ssub.s32 %s15, 1
      %s21 = ssub.s32 %s15, 2
      %s22 = sadd.s32 %s15, 1
      %s24 = sadd.s32 %s23, 1
      %p27 = scmp.eq.s32.totalorder %s15, 1
      %p28 = scmp.ne.s32.totalorder %s23, %s25
      %p29 = scmp.eq.s32.totalorder %s15, 0
      %p30 = por %p28, %p29
      %p31 = scmp.ne.s32.totalorder %s23, %s25
      %p32 = scmp.eq.s32.totalorder %s20, 1
      %p33 = por %p31, %p32
      %p34 = scmp.ne.s32.totalorder %s25, %s26
      %p35 = scmp.eq.s32.totalorder %s20, 0
      %p36 = por %p34, %p35
      %p37 = scmp.ne.s32.totalorder %s25, %s26
      %p38 = scmp.eq.s32.totalorder %s21, 1
      %p39 = por %p37, %p38
      %p41 = scmp.ne.s32.totalorder %s26, %s40
      %p42 = scmp.eq.s32.totalorder %s21, 0
      %p43 = por %p41, %p42
      %s44 = ssub.s32 %s15, %s22
      %p45 = scmp.eq.s32.totalorder %s44, 0
      %s47 = sadd.s32 %s46, 1
      %s48 = scalar_select %p45, %s46, %s47
      %p51 = pneg %p45
      %p52 = scmp.eq.s32.totalorder %s15, 1
      %p53 = por %p51, %p52
      %p54 = scmp.ne.s32.totalorder %s46, %s49
      %p55 = scmp.eq.s32.totalorder %s15, 0
      %p56 = por %p54, %p55
      %p57 = scmp.ne.s32.totalorder %s46, %s49
      %p58 = scmp.eq.s32.totalorder %s20, 1
      %p59 = por %p57, %p58
      %p60 = scmp.ne.s32.totalorder %s49, %s50
      %p61 = scmp.eq.s32.totalorder %s20, 0
      %p62 = por %p60, %p61
      %p63 = scmp.ne.s32.totalorder %s49, %s50
      %p64 = scmp.eq.s32.totalorder %s21, 1
      %p65 = por %p63, %p64
      %p67 = scmp.ne.s32.totalorder %s50, %s66
      %p68 = scmp.eq.s32.totalorder %s21, 0
      %p69 = por %p67, %p68
      %s70 = ssub.s32 %s15, %s22
      %p71 = scmp.eq.s32.totalorder %s70, 0
      %s73 = sadd.s32 %s72, 1
      %s74 = scalar_select %p71, %s72, %s73
      %p77 = pneg %p71
      %p78 = scmp.eq.s32.totalorder %s15, 1
      %p79 = por %p77, %p78
      %p80 = scmp.ne.s32.totalorder %s72, %s75
      %p81 = scmp.eq.s32.totalorder %s15, 0
      %p82 = por %p80, %p81
      %p83 = scmp.ne.s32.totalorder %s72, %s75
      %p84 = scmp.eq.s32.totalorder %s20, 1
      %p85 = por %p83, %p84
      %p86 = scmp.ne.s32.totalorder %s75, %s76
      %p87 = scmp.eq.s32.totalorder %s20, 0
      %p88 = por %p86, %p87
      %p89 = scmp.ne.s32.totalorder %s75, %s76
      %p90 = scmp.eq.s32.totalorder %s21, 1
      %p91 = por %p89, %p90
      %p93 = scmp.ne.s32.totalorder %s76, %s92
      %p94 = scmp.eq.s32.totalorder %s21, 0
      %p95 = por %p93, %p94
      %p96 = scmp.le.s32.totalorder 1, %s15
      %p97 = scmp.lt.s32.totalorder %s15, 3
      %p98 = pnand %p96, %p97
      %p99 = pneg %p98
      // Predicated region
      $region9: #{tpu_custom_call.1} parent=5 // pred_check
        _
      $region10: #{tpu_custom_call.1} parent=5 // pred_check_branch
        %101 = sbr.rel (%p98) target = $region12
      $region11: #{tpu_custom_call.1} parent=5 // pred_region
        %s102 = ssub.s32 %s15, 1
        // Predicated region
        $region13: #{tpu_custom_call.1} parent=11 // pred_check
          %p103 = pneg %p36
        $region14: #{tpu_custom_call.1} parent=11 // pred_check_branch
          %105 = sbr.rel (%p103) target = $region16
        $region15: #{tpu_custom_call.1} parent=11 // pred_region
          %s107 = ssub.s32 16, 16
          %108 = vsyncadd [#allocation7], %s107
          %111 = dma.hbm_to_smem %s0, 16, [#allocation4], [#allocation7]
        $region16: #{tpu_custom_call.1} parent=11 // pred_fallthru
          _
      $region12: #{tpu_custom_call.1} parent=5 // pred_fallthru
        _
      %p112 = scmp.lt.s32.totalorder %s15, 2
      // Predicated region
      $region17: #{tpu_custom_call.1} parent=5 // pred_check
        %p113 = pneg %p112
      $region18: #{tpu_custom_call.1} parent=5 // pred_check_branch
        %115 = sbr.rel (%p113) target = $region20
      $region19: #{tpu_custom_call.1} parent=5 // pred_region
        // Predicated region
        $region21: #{tpu_custom_call.1} parent=19 // pred_check
          %p116 = pneg %p56
        $region22: #{tpu_custom_call.1} parent=19 // pred_check_branch
          %118 = sbr.rel (%p116) target = $region24
        $region23: #{tpu_custom_call.1} parent=19 // pred_region
          %s119 = sand.u32 %s46, 1
          %s120 = scalar_lea.sflag [#allocation5], %s119
          %s121 = sand.u32 %s46, 1
          %s122 = smul.addr %s121, 8
          %s123 = scalar_lea.vmem [#allocation8], %s122
          %s125 = ssub.s32 128, 128
          %126 = vsyncadd %s120, %s125
          %s127 = smul.addr %s15, 2
          %s128 = smul.addr %s127, 64
          %s129 = scalar_lea.hbm %s1, %s128
          %s131 = sshll.u32 %s123, 4
          %s132 = int_to_ptr.vmem [resolvable:$true] %s131
          %134 = dma.hbm_to_vmem [thread:$0]  %s129, 128, %s132, %s120
        $region24: #{tpu_custom_call.1} parent=19 // pred_fallthru
          _
      $region20: #{tpu_custom_call.1} parent=5 // pred_fallthru
        _
      %p135 = scmp.le.s32.totalorder 1, %s15
      %p136 = scmp.lt.s32.totalorder %s15, 3
      %p137 = pnand %p135, %p136
      %p138 = pneg %p137
      // Predicated region
      $region25: #{tpu_custom_call.1} parent=5 // pred_check
        _
      $region26: #{tpu_custom_call.1} parent=5 // pred_check_branch
        %140 = sbr.rel (%p137) target = $region28
      $region27: #{tpu_custom_call.1} parent=5 // pred_region
        %s141 = ssub.s32 %s15, 1
        // Predicated region
        $region29: #{tpu_custom_call.1} parent=27 // pred_check
          %p142 = pneg %p36
        $region30: #{tpu_custom_call.1} parent=27 // pred_check_branch
          %144 = sbr.rel (%p142) target = $region32
        $region31: #{tpu_custom_call.1} parent=27 // pred_region
          %145 = dma.done [#allocation7], 16
        $region32: #{tpu_custom_call.1} parent=27 // pred_fallthru
          _
        %s146 = sand.u32 %s49, 1
        %s147 = scalar_lea.sflag [#allocation5], %s146
        %s148 = sand.u32 %s49, 1
        %s149 = smul.addr %s148, 8
        %s150 = scalar_lea.vmem [#allocation8], %s149
        // Predicated region
        $region33: #{tpu_custom_call.1} parent=27 // pred_check
          %p151 = pneg %p62
        $region34: #{tpu_custom_call.1} parent=27 // pred_check_branch
          %153 = sbr.rel (%p151) target = $region36
        $region35: #{tpu_custom_call.1} parent=27 // pred_region
          %154 = dma.done %s147, 128
        $region36: #{tpu_custom_call.1} parent=27 // pred_fallthru
          _
        %155 = sfence
        %p156 = pneg %p36
        %p157 = pneg %p33
        %s158 = sand.u32 %s49, 1
        %s159 = scalar_lea.sflag [#allocation5], %s158
        %s160 = sand.u32 %s49, 1
        %s161 = smul.addr %s160, 8
        %s162 = scalar_lea.vmem [#allocation8], %s161
        %p163 = pneg %p62
        %p164 = pneg %p59
        %p165 = pneg %p88
        %p166 = pneg %p85
        %s167 = sand.u32 %s75, 1
        %s168 = scalar_lea.sflag [#allocation6], %s167
        %s169 = sand.u32 %s75, 1
        %s170 = smul.addr %s169, 8
        %s171 = scalar_lea.vmem [#allocation9], %s170
        %v172 = vld [vmem:[%s150] sm:$0xff]
        %v174 = vcombine.high %v172, %v172
        %vm176 = vcmask 1043456
        %v177 = vsel %vm176, %v172, -inf
        %v178 = vrot.slane %v177, 4
        %v179 = vmax.f32 %v177, %v178
        %v180 = vrot.slane %v179, 2
        %v181 = vmax.f32 %v179, %v180
        %v182 = vrot.slane %v181, 1
        %v183 = vmax.f32 %v181, %v182
        %v184 = vsel %vm176, %v174, -inf
        %v185 = vrot.slane %v184, 4
        %v186 = vmax.f32 %v184, %v185
        %v187 = vrot.slane %v186, 2
        %v188 = vmax.f32 %v186, %v187
        %v189 = vrot.slane %v188, 1
        %v190 = vmax.f32 %v188, %v189
        %v191 = vsel %vm176, %v172, 0.0
        %v192 = vrot.slane %v191, 4
        %v193 = vadd.f32 %v191, %v192
        %v194 = vrot.slane %v193, 2
        %v195 = vadd.f32 %v193, %v194
        %v196 = vrot.slane %v195, 1
        %v197 = vadd.f32 %v195, %v196
        %v198 = vsel %vm176, %v174, 0.0
        %v199 = vrot.slane %v198, 4
        %v200 = vadd.f32 %v198, %v199
        %v201 = vrot.slane %v200, 2
        %v202 = vadd.f32 %v200, %v201
        %v203 = vrot.slane %v202, 1
        %v204 = vadd.f32 %v202, %v203
        %v205 = vrcp.pop 4.0
        %v206 = vmul.f32 %v197, %v205
        %v207 = vmul.f32 %v204, %v205
        %208 = vst [vmem:[#allocation2] sm:$0xff] 0.0
        %209 = vst [vmem:[#allocation2 + $0x8] sm:$0xff] 0.0
        %210 = vst [vmem:[#allocation2 + $0x10] sm:$0xff] 0.0
        %211 = vst [vmem:[#allocation3] sm:$0xff] 0.0
        %212 = vst [vmem:[#allocation3 + $0x8] sm:$0xff] 0.0
        %213 = vst [vmem:[#allocation3 + $0x10] sm:$0xff] 0.0
        %215 = vrot.lane.b32.xlu0 %v183, 112
        %v216 = vpop.permute.xlu0 %215
        %218 = vrot.lane.b32.xlu0 %v183, 96
        %v219 = vpop.permute.xlu0 %218
        %221 = vrot.lane.b32.xlu0 %v183, 80
        %v222 = vpop.permute.xlu0 %221
        %224 = vrot.lane.b32.xlu0 %v183, 64
        %v225 = vpop.permute.xlu0 %224
        %227 = vrot.lane.b32.xlu0 %v183, 48
        %v228 = vpop.permute.xlu0 %227
        %230 = vrot.lane.b32.xlu0 %v183, 32
        %v231 = vpop.permute.xlu0 %230
        %233 = vrot.lane.b32.xlu0 %v183, 16
        %v234 = vpop.permute.xlu0 %233
        %237 = vrot.lane.b32.xlu0 %v190, 112
        %v238 = vpop.permute.xlu0 %237
        %240 = vrot.lane.b32.xlu0 %v190, 96
        %v241 = vpop.permute.xlu0 %240
        %243 = vrot.lane.b32.xlu0 %v190, 80
        %v244 = vpop.permute.xlu0 %243
        %246 = vrot.lane.b32.xlu0 %v190, 64
        %v247 = vpop.permute.xlu0 %246
        %249 = vrot.lane.b32.xlu0 %v190, 48
        %v250 = vpop.permute.xlu0 %249
        %252 = vrot.lane.b32.xlu0 %v190, 32
        %v253 = vpop.permute.xlu0 %252
        %255 = vrot.lane.b32.xlu0 %v190, 16
        %v256 = vpop.permute.xlu0 %255
        %v258 = vcombine.low %v183, %v219
        %v260 = vunpack.c.l.s4 1983009808
        %v261 = vunpack.c.0.s8 %v260
        %v262 = vlaneseq
        %v263 = vshrl.u32 %v262, 7
        %v264 = vsub.s32 %v261, %v263
        %v265 = vrot.slane %v258, %v264
        %v266 = vcombine.low %v216, %v222
        %v268 = vunpack.c.l.s4 1983009808
        %v269 = vunpack.c.0.s8 %v268
        %v270 = vlaneseq
        %v271 = vshrl.u32 %v270, 7
        %v272 = vsub.s32 %v269, %v271
        %v273 = vrot.slane %v266, %v272
        %v274 = vcombine.low %v225, %v231
        %v276 = vunpack.c.l.s4 1983009808
        %v277 = vunpack.c.0.s8 %v276
        %v278 = vlaneseq
        %v279 = vshrl.u32 %v278, 7
        %v280 = vsub.s32 %v277, %v279
        %v281 = vrot.slane %v274, %v280
        %v282 = vcombine.low %v228, %v234
        %v284 = vunpack.c.l.s4 1983009808
        %v285 = vunpack.c.0.s8 %v284
        %v286 = vlaneseq
        %v287 = vshrl.u32 %v286, 7
        %v288 = vsub.s32 %v285, %v287
        %v289 = vrot.slane %v282, %v288
        %v290 = vcombine.low %v265, %v273
        %v292 = vunpack.c.l.s4 1934713408
        %v293 = vunpack.c.0.s8 %v292
        %v294 = vlaneseq
        %v295 = vshrl.u32 %v294, 7
        %v296 = vsub.s32 %v293, %v295
        %v297 = vrot.slane %v290, %v296
        %v298 = vcombine.low %v281, %v289
        %v300 = vunpack.c.l.s4 1934713408
        %v301 = vunpack.c.0.s8 %v300
        %v302 = vlaneseq
        %v303 = vshrl.u32 %v302, 7
        %v304 = vsub.s32 %v301, %v303
        %v305 = vrot.slane %v298, %v304
        %v306 = vcombine.low %v297, %v305
        %v307 = vcombine.low %v190, %v241
        %v309 = vunpack.c.l.s4 1983009808
        %v310 = vunpack.c.0.s8 %v309
        %v311 = vlaneseq
        %v312 = vshrl.u32 %v311, 7
        %v313 = vsub.s32 %v310, %v312
        %v314 = vrot.slane %v307, %v313
        %v315 = vcombine.low %v238, %v244
        %v317 = vunpack.c.l.s4 1983009808
        %v318 = vunpack.c.0.s8 %v317
        %v319 = vlaneseq
        %v320 = vshrl.u32 %v319, 7
        %v321 = vsub.s32 %v318, %v320
        %v322 = vrot.slane %v315, %v321
        %v323 = vcombine.low %v247, %v253
        %v325 = vunpack.c.l.s4 1983009808
        %v326 = vunpack.c.0.s8 %v325
        %v327 = vlaneseq
        %v328 = vshrl.u32 %v327, 7
        %v329 = vsub.s32 %v326, %v328
        %v330 = vrot.slane %v323, %v329
        %v331 = vcombine.low %v250, %v256
        %v333 = vunpack.c.l.s4 1983009808
        %v334 = vunpack.c.0.s8 %v333
        %v335 = vlaneseq
        %v336 = vshrl.u32 %v335, 7
        %v337 = vsub.s32 %v334, %v336
        %v338 = vrot.slane %v331, %v337
        %v339 = vcombine.low %v314, %v322
        %v341 = vunpack.c.l.s4 1934713408
        %v342 = vunpack.c.0.s8 %v341
        %v343 = vlaneseq
        %v344 = vshrl.u32 %v343, 7
        %v345 = vsub.s32 %v342, %v344
        %v346 = vrot.slane %v339, %v345
        %v347 = vcombine.low %v330, %v338
        %v349 = vunpack.c.l.s4 1934713408
        %v350 = vunpack.c.0.s8 %v349
        %v351 = vlaneseq
        %v352 = vshrl.u32 %v351, 7
        %v353 = vsub.s32 %v350, %v352
        %v354 = vrot.slane %v347, %v353
        %v355 = vcombine.low %v346, %v354
        %358 = vrot.lane.b32.xlu0 %v306, 3
        %v359 = vpop.permute.xlu0 %358
        %360 = vrot.lane.b32.xlu0 %v355, 3
        %v361 = vpop.permute.xlu0 %360
        %vm364 = vcmask 154648
        %365 = vst.msk [vmem:[#allocation2 + $0x3] sm:$0xff] %vm364, %v359
        %366 = vst.msk [vmem:[#allocation2 + $0xb] sm:$0xff] %vm364, %v361
        %368 = vrot.lane.b32.xlu0 %v206, 112
        %v369 = vpop.permute.xlu0 %368
        %371 = vrot.lane.b32.xlu0 %v206, 96
        %v372 = vpop.permute.xlu0 %371
        %374 = vrot.lane.b32.xlu0 %v206, 80
        %v375 = vpop.permute.xlu0 %374
        %377 = vrot.lane.b32.xlu0 %v206, 64
        %v378 = vpop.permute.xlu0 %377
        %380 = vrot.lane.b32.xlu0 %v206, 48
        %v381 = vpop.permute.xlu0 %380
        %383 = vrot.lane.b32.xlu0 %v206, 32
        %v384 = vpop.permute.xlu0 %383
        %386 = vrot.lane.b32.xlu0 %v206, 16
        %v387 = vpop.permute.xlu0 %386
        %390 = vrot.lane.b32.xlu0 %v207, 112
        %v391 = vpop.permute.xlu0 %390
        %393 = vrot.lane.b32.xlu0 %v207, 96
        %v394 = vpop.permute.xlu0 %393
        %396 = vrot.lane.b32.xlu0 %v207, 80
        %v397 = vpop.permute.xlu0 %396
        %399 = vrot.lane.b32.xlu0 %v207, 64
        %v400 = vpop.permute.xlu0 %399
        %402 = vrot.lane.b32.xlu0 %v207, 48
        %v403 = vpop.permute.xlu0 %402
        %405 = vrot.lane.b32.xlu0 %v207, 32
        %v406 = vpop.permute.xlu0 %405
        %408 = vrot.lane.b32.xlu0 %v207, 16
        %v409 = vpop.permute.xlu0 %408
        %v411 = vcombine.low %v206, %v372
        %v413 = vunpack.c.l.s4 1983009808
        %v414 = vunpack.c.0.s8 %v413
        %v415 = vlaneseq
        %v416 = vshrl.u32 %v415, 7
        %v417 = vsub.s32 %v414, %v416
        %v418 = vrot.slane %v411, %v417
        %v419 = vcombine.low %v369, %v375
        %v421 = vunpack.c.l.s4 1983009808
        %v422 = vunpack.c.0.s8 %v421
        %v423 = vlaneseq
        %v424 = vshrl.u32 %v423, 7
        %v425 = vsub.s32 %v422, %v424
        %v426 = vrot.slane %v419, %v425
        %v427 = vcombine.low %v378, %v384
        %v429 = vunpack.c.l.s4 1983009808
        %v430 = vunpack.c.0.s8 %v429
        %v431 = vlaneseq
        %v432 = vshrl.u32 %v431, 7
        %v433 = vsub.s32 %v430, %v432
        %v434 = vrot.slane %v427, %v433
        %v435 = vcombine.low %v381, %v387
        %v437 = vunpack.c.l.s4 1983009808
        %v438 = vunpack.c.0.s8 %v437
        %v439 = vlaneseq
        %v440 = vshrl.u32 %v439, 7
        %v441 = vsub.s32 %v438, %v440
        %v442 = vrot.slane %v435, %v441
        %v443 = vcombine.low %v418, %v426
        %v445 = vunpack.c.l.s4 1934713408
        %v446 = vunpack.c.0.s8 %v445
        %v447 = vlaneseq
        %v448 = vshrl.u32 %v447, 7
        %v449 = vsub.s32 %v446, %v448
        %v450 = vrot.slane %v443, %v449
        %v451 = vcombine.low %v434, %v442
        %v453 = vunpack.c.l.s4 1934713408
        %v454 = vunpack.c.0.s8 %v453
        %v455 = vlaneseq
        %v456 = vshrl.u32 %v455, 7
        %v457 = vsub.s32 %v454, %v456
        %v458 = vrot.slane %v451, %v457
        %v459 = vcombine.low %v450, %v458
        %v460 = vcombine.low %v207, %v394
        %v462 = vunpack.c.l.s4 1983009808
        %v463 = vunpack.c.0.s8 %v462
        %v464 = vlaneseq
        %v465 = vshrl.u32 %v464, 7
        %v466 = vsub.s32 %v463, %v465
        %v467 = vrot.slane %v460, %v466
        %v468 = vcombine.low %v391, %v397
        %v470 = vunpack.c.l.s4 1983009808
        %v471 = vunpack.c.0.s8 %v470
        %v472 = vlaneseq
        %v473 = vshrl.u32 %v472, 7
        %v474 = vsub.s32 %v471, %v473
        %v475 = vrot.slane %v468, %v474
        %v476 = vcombine.low %v400, %v406
        %v478 = vunpack.c.l.s4 1983009808
        %v479 = vunpack.c.0.s8 %v478
        %v480 = vlaneseq
        %v481 = vshrl.u32 %v480, 7
        %v482 = vsub.s32 %v479, %v481
        %v483 = vrot.slane %v476, %v482
        %v484 = vcombine.low %v403, %v409
        %v486 = vunpack.c.l.s4 1983009808
        %v487 = vunpack.c.0.s8 %v486
        %v488 = vlaneseq
        %v489 = vshrl.u32 %v488, 7
        %v490 = vsub.s32 %v487, %v489
        %v491 = vrot.slane %v484, %v490
        %v492 = vcombine.low %v467, %v475
        %v494 = vunpack.c.l.s4 1934713408
        %v495 = vunpack.c.0.s8 %v494
        %v496 = vlaneseq
        %v497 = vshrl.u32 %v496, 7
        %v498 = vsub.s32 %v495, %v497
        %v499 = vrot.slane %v492, %v498
        %v500 = vcombine.low %v483, %v491
        %v502 = vunpack.c.l.s4 1934713408
        %v503 = vunpack.c.0.s8 %v502
        %v504 = vlaneseq
        %v505 = vshrl.u32 %v504, 7
        %v506 = vsub.s32 %v503, %v505
        %v507 = vrot.slane %v500, %v506
        %v508 = vcombine.low %v499, %v507
        %511 = vrot.lane.b32.xlu0 %v459, 3
        %v512 = vpop.permute.xlu0 %511
        %513 = vrot.lane.b32.xlu0 %v508, 3
        %v514 = vpop.permute.xlu0 %513
        %517 = vst.msk [vmem:[#allocation3 + $0x3] sm:$0xff] %vm364, %v512
        %518 = vst.msk [vmem:[#allocation3 + $0xb] sm:$0xff] %vm364, %v514
        %v519 = vld [vmem:[#allocation2] sm:$0xff]
        %v520 = vld [vmem:[#allocation2 + $0x8] sm:$0xff]
        %v521 = vld [vmem:[#allocation2 + $0x10] sm:$0x3f]
        %v522 = vld [vmem:[#allocation3] sm:$0xff]
        %v523 = vld [vmem:[#allocation3 + $0x8] sm:$0xff]
        %v524 = vld [vmem:[#allocation3 + $0x10] sm:$0x3f]
        %s525 = sld [smem:[#allocation4]]
        %s526 = sld [smem:[#allocation4 + $0x31]]
        %v527 = vstv %s525
        %v528 = vmul.f32 %v527, %v519
        %v529 = vmul.f32 %v527, %v520
        %v530 = vadd.f32 %v528, 0.0
        %v531 = vadd.f32 %v529, 0.0
        %v532 = vstv %s526
        %v533 = vmul.f32 %v532, %v522
        %v534 = vmul.f32 %v532, %v523
        %v535 = vadd.f32 %v533, 0.0
        %v536 = vadd.f32 %v534, 0.0
        %s537 = sld [smem:[#allocation4 + $0x7]]
        %s538 = sld [smem:[#allocation4 + $0x38]]
        %v539 = vstv %s537
        %v540 = vmul.f32 %v539, %v519
        %v541 = vmul.f32 %v539, %v520
        %v542 = vmul.f32 %v539, %v521
        %vm546 = vcmask 1046528
        %v547 = vrot.slane %v540, 1
        %v548 = vrot.slane %v541, 1
        %v549 = vsel %vm546, %v547, %v548
        %v550 = vrot.slane %v542, 1
        %v551 = vsel %vm546, %v548, %v550
        %v554 = vadd.f32 %v530, %v549
        %v555 = vadd.f32 %v531, %v551
        %v556 = vstv %s538
        %v557 = vmul.f32 %v556, %v522
        %v558 = vmul.f32 %v556, %v523
        %v559 = vmul.f32 %v556, %v524
        %v563 = vrot.slane %v557, 1
        %v564 = vrot.slane %v558, 1
        %v565 = vsel %vm546, %v563, %v564
        %v566 = vrot.slane %v559, 1
        %v567 = vsel %vm546, %v564, %v566
        %v570 = vadd.f32 %v535, %v565
        %v571 = vadd.f32 %v536, %v567
        %s572 = sld [smem:[#allocation4 + $0xe]]
        %s573 = sld [smem:[#allocation4 + $0x3f]]
        %v574 = vstv %s572
        %v575 = vmul.f32 %v574, %v519
        %v576 = vmul.f32 %v574, %v520
        %v577 = vmul.f32 %v574, %v521
        %vm581 = vcmask 1045504
        %v582 = vrot.slane %v575, 2
        %v583 = vrot.slane %v576, 2
        %v584 = vsel %vm581, %v582, %v583
        %v585 = vrot.slane %v577, 2
        %v586 = vsel %vm581, %v583, %v585
        %v589 = vadd.f32 %v554, %v584
        %v590 = vadd.f32 %v555, %v586
        %v591 = vstv %s573
        %v592 = vmul.f32 %v591, %v522
        %v593 = vmul.f32 %v591, %v523
        %v594 = vmul.f32 %v591, %v524
        %v598 = vrot.slane %v592, 2
        %v599 = vrot.slane %v593, 2
        %v600 = vsel %vm581, %v598, %v599
        %v601 = vrot.slane %v594, 2
        %v602 = vsel %vm581, %v599, %v601
        %v605 = vadd.f32 %v570, %v600
        %v606 = vadd.f32 %v571, %v602
        %s607 = sld [smem:[#allocation4 + $0x15]]
        %s608 = sld [smem:[#allocation4 + $0x46]]
        %v609 = vstv %s607
        %v610 = vmul.f32 %v609, %v519
        %v611 = vmul.f32 %v609, %v520
        %v612 = vmul.f32 %v609, %v521
        %vm616 = vcmask 1044480
        %v617 = vrot.slane %v610, 3
        %v618 = vrot.slane %v611, 3
        %v619 = vsel %vm616, %v617, %v618
        %v620 = vrot.slane %v612, 3
        %v621 = vsel %vm616, %v618, %v620
        %v624 = vadd.f32 %v589, %v619
        %v625 = vadd.f32 %v590, %v621
        %v626 = vstv %s608
        %v627 = vmul.f32 %v626, %v522
        %v628 = vmul.f32 %v626, %v523
        %v629 = vmul.f32 %v626, %v524
        %v633 = vrot.slane %v627, 3
        %v634 = vrot.slane %v628, 3
        %v635 = vsel %vm616, %v633, %v634
        %v636 = vrot.slane %v629, 3
        %v637 = vsel %vm616, %v634, %v636
        %v640 = vadd.f32 %v605, %v635
        %v641 = vadd.f32 %v606, %v637
        %s642 = sld [smem:[#allocation4 + $0x1c]]
        %s643 = sld [smem:[#allocation4 + $0x4d]]
        %v644 = vstv %s642
        %v645 = vmul.f32 %v644, %v519
        %v646 = vmul.f32 %v644, %v520
        %v647 = vmul.f32 %v644, %v521
        %v651 = vrot.slane %v645, 4
        %v652 = vrot.slane %v646, 4
        %v653 = vsel %vm176, %v651, %v652
        %v654 = vrot.slane %v647, 4
        %v655 = vsel %vm176, %v652, %v654
        %v658 = vadd.f32 %v624, %v653
        %v659 = vadd.f32 %v625, %v655
        %v660 = vstv %s643
        %v661 = vmul.f32 %v660, %v522
        %v662 = vmul.f32 %v660, %v523
        %v663 = vmul.f32 %v660, %v524
        %v667 = vrot.slane %v661, 4
        %v668 = vrot.slane %v662, 4
        %v669 = vsel %vm176, %v667, %v668
        %v670 = vrot.slane %v663, 4
        %v671 = vsel %vm176, %v668, %v670
        %v674 = vadd.f32 %v640, %v669
        %v675 = vadd.f32 %v641, %v671
        %s676 = sld [smem:[#allocation4 + $0x23]]
        %s677 = sld [smem:[#allocation4 + $0x54]]
        %v678 = vstv %s676
        %v679 = vmul.f32 %v678, %v519
        %v680 = vmul.f32 %v678, %v520
        %v681 = vmul.f32 %v678, %v521
        %vm685 = vcmask 1042432
        %v686 = vrot.slane %v679, 5
        %v687 = vrot.slane %v680, 5
        %v688 = vsel %vm685, %v686, %v687
        %v689 = vrot.slane %v681, 5
        %v690 = vsel %vm685, %v687, %v689
        %v693 = vadd.f32 %v658, %v688
        %v694 = vadd.f32 %v659, %v690
        %v695 = vstv %s677
        %v696 = vmul.f32 %v695, %v522
        %v697 = vmul.f32 %v695, %v523
        %v698 = vmul.f32 %v695, %v524
        %v702 = vrot.slane %v696, 5
        %v703 = vrot.slane %v697, 5
        %v704 = vsel %vm685, %v702, %v703
        %v705 = vrot.slane %v698, 5
        %v706 = vsel %vm685, %v703, %v705
        %v709 = vadd.f32 %v674, %v704
        %v710 = vadd.f32 %v675, %v706
        %s711 = sld [smem:[#allocation4 + $0x2a]]
        %s712 = sld [smem:[#allocation4 + $0x5b]]
        %v713 = vstv %s711
        %v714 = vmul.f32 %v713, %v519
        %v715 = vmul.f32 %v713, %v520
        %v716 = vmul.f32 %v713, %v521
        %vm720 = vcmask 1041408
        %v721 = vrot.slane %v714, 6
        %v722 = vrot.slane %v715, 6
        %v723 = vsel %vm720, %v721, %v722
        %v724 = vrot.slane %v716, 6
        %v725 = vsel %vm720, %v722, %v724
        %v728 = vadd.f32 %v693, %v723
        %v729 = vadd.f32 %v694, %v725
        %v730 = vstv %s712
        %v731 = vmul.f32 %v730, %v522
        %v732 = vmul.f32 %v730, %v523
        %v733 = vmul.f32 %v730, %v524
        %v737 = vrot.slane %v731, 6
        %v738 = vrot.slane %v732, 6
        %v739 = vsel %vm720, %v737, %v738
        %v740 = vrot.slane %v733, 6
        %v741 = vsel %vm720, %v738, %v740
        %v744 = vadd.f32 %v709, %v739
        %v745 = vadd.f32 %v710, %v741
        %s746 = sld [smem:[#allocation4 + $0x1]]
        %s747 = sld [smem:[#allocation4 + $0x32]]
        %v748 = vstv %s746
        %v749 = vmul.f32 %v748, %v519
        %v750 = vmul.f32 %v748, %v520
        %v751 = vadd.f32 %v749, 0.0
        %v752 = vadd.f32 %v750, 0.0
        %v753 = vstv %s747
        %v754 = vmul.f32 %v753, %v522
        %v755 = vmul.f32 %v753, %v523
        %v756 = vadd.f32 %v754, 0.0
        %v757 = vadd.f32 %v755, 0.0
        %s758 = sld [smem:[#allocation4 + $0x8]]
        %s759 = sld [smem:[#allocation4 + $0x39]]
        %v760 = vstv %s758
        %v761 = vmul.f32 %v760, %v519
        %v762 = vmul.f32 %v760, %v520
        %v763 = vmul.f32 %v760, %v521
        %v767 = vrot.slane %v761, 1
        %v768 = vrot.slane %v762, 1
        %v769 = vsel %vm546, %v767, %v768
        %v770 = vrot.slane %v763, 1
        %v771 = vsel %vm546, %v768, %v770
        %v774 = vadd.f32 %v751, %v769
        %v775 = vadd.f32 %v752, %v771
        %v776 = vstv %s759
        %v777 = vmul.f32 %v776, %v522
        %v778 = vmul.f32 %v776, %v523
        %v779 = vmul.f32 %v776, %v524
        %v783 = vrot.slane %v777, 1
        %v784 = vrot.slane %v778, 1
        %v785 = vsel %vm546, %v783, %v784
        %v786 = vrot.slane %v779, 1
        %v787 = vsel %vm546, %v784, %v786
        %v790 = vadd.f32 %v756, %v785
        %v791 = vadd.f32 %v757, %v787
        %s792 = sld [smem:[#allocation4 + $0xf]]
        %s793 = sld [smem:[#allocation4 + $0x40]]
        %v794 = vstv %s792
        %v795 = vmul.f32 %v794, %v519
        %v796 = vmul.f32 %v794, %v520
        %v797 = vmul.f32 %v794, %v521
        %v801 = vrot.slane %v795, 2
        %v802 = vrot.slane %v796, 2
        %v803 = vsel %vm581, %v801, %v802
        %v804 = vrot.slane %v797, 2
        %v805 = vsel %vm581, %v802, %v804
        %v808 = vadd.f32 %v774, %v803
        %v809 = vadd.f32 %v775, %v805
        %v810 = vstv %s793
        %v811 = vmul.f32 %v810, %v522
        %v812 = vmul.f32 %v810, %v523
        %v813 = vmul.f32 %v810, %v524
        %v817 = vrot.slane %v811, 2
        %v818 = vrot.slane %v812, 2
        %v819 = vsel %vm581, %v817, %v818
        %v820 = vrot.slane %v813, 2
        %v821 = vsel %vm581, %v818, %v820
        %v824 = vadd.f32 %v790, %v819
        %v825 = vadd.f32 %v791, %v821
        %s826 = sld [smem:[#allocation4 + $0x16]]
        %s827 = sld [smem:[#allocation4 + $0x47]]
        %v828 = vstv %s826
        %v829 = vmul.f32 %v828, %v519
        %v830 = vmul.f32 %v828, %v520
        %v831 = vmul.f32 %v828, %v521
        %v835 = vrot.slane %v829, 3
        %v836 = vrot.slane %v830, 3
        %v837 = vsel %vm616, %v835, %v836
        %v838 = vrot.slane %v831, 3
        %v839 = vsel %vm616, %v836, %v838
        %v842 = vadd.f32 %v808, %v837
        %v843 = vadd.f32 %v809, %v839
        %v844 = vstv %s827
        %v845 = vmul.f32 %v844, %v522
        %v846 = vmul.f32 %v844, %v523
        %v847 = vmul.f32 %v844, %v524
        %v851 = vrot.slane %v845, 3
        %v852 = vrot.slane %v846, 3
        %v853 = vsel %vm616, %v851, %v852
        %v854 = vrot.slane %v847, 3
        %v855 = vsel %vm616, %v852, %v854
        %v858 = vadd.f32 %v824, %v853
        %v859 = vadd.f32 %v825, %v855
        %s860 = sld [smem:[#allocation4 + $0x1d]]
        %s861 = sld [smem:[#allocation4 + $0x4e]]
        %v862 = vstv %s860
        %v863 = vmul.f32 %v862, %v519
        %v864 = vmul.f32 %v862, %v520
        %v865 = vmul.f32 %v862, %v521
        %v869 = vrot.slane %v863, 4
        %v870 = vrot.slane %v864, 4
        %v871 = vsel %vm176, %v869, %v870
        %v872 = vrot.slane %v865, 4
        %v873 = vsel %vm176, %v870, %v872
        %v876 = vadd.f32 %v842, %v871
        %v877 = vadd.f32 %v843, %v873
        %v878 = vstv %s861
        %v879 = vmul.f32 %v878, %v522
        %v880 = vmul.f32 %v878, %v523
        %v881 = vmul.f32 %v878, %v524
        %v885 = vrot.slane %v879, 4
        %v886 = vrot.slane %v880, 4
        %v887 = vsel %vm176, %v885, %v886
        %v888 = vrot.slane %v881, 4
        %v889 = vsel %vm176, %v886, %v888
        %v892 = vadd.f32 %v858, %v887
        %v893 = vadd.f32 %v859, %v889
        %s894 = sld [smem:[#allocation4 + $0x24]]
        %s895 = sld [smem:[#allocation4 + $0x55]]
        %v896 = vstv %s894
        %v897 = vmul.f32 %v896, %v519
        %v898 = vmul.f32 %v896, %v520
        %v899 = vmul.f32 %v896, %v521
        %v903 = vrot.slane %v897, 5
        %v904 = vrot.slane %v898, 5
        %v905 = vsel %vm685, %v903, %v904
        %v906 = vrot.slane %v899, 5
        %v907 = vsel %vm685, %v904, %v906
        %v910 = vadd.f32 %v876, %v905
        %v911 = vadd.f32 %v877, %v907
        %v912 = vstv %s895
        %v913 = vmul.f32 %v912, %v522
        %v914 = vmul.f32 %v912, %v523
        %v915 = vmul.f32 %v912, %v524
        %v919 = vrot.slane %v913, 5
        %v920 = vrot.slane %v914, 5
        %v921 = vsel %vm685, %v919, %v920
        %v922 = vrot.slane %v915, 5
        %v923 = vsel %vm685, %v920, %v922
        %v926 = vadd.f32 %v892, %v921
        %v927 = vadd.f32 %v893, %v923
        %s928 = sld [smem:[#allocation4 + $0x2b]]
        %s929 = sld [smem:[#allocation4 + $0x5c]]
        %v930 = vstv %s928
        %v931 = vmul.f32 %v930, %v519
        %v932 = vmul.f32 %v930, %v520
        %v933 = vmul.f32 %v930, %v521
        %v937 = vrot.slane %v931, 6
        %v938 = vrot.slane %v932, 6
        %v939 = vsel %vm720, %v937, %v938
        %v940 = vrot.slane %v933, 6
        %v941 = vsel %vm720, %v938, %v940
        %v944 = vadd.f32 %v910, %v939
        %v945 = vadd.f32 %v911, %v941
        %v946 = vstv %s929
        %v947 = vmul.f32 %v946, %v522
        %v948 = vmul.f32 %v946, %v523
        %v949 = vmul.f32 %v946, %v524
        %v953 = vrot.slane %v947, 6
        %v954 = vrot.slane %v948, 6
        %v955 = vsel %vm720, %v953, %v954
        %v956 = vrot.slane %v949, 6
        %v957 = vsel %vm720, %v954, %v956
        %v960 = vadd.f32 %v926, %v955
        %v961 = vadd.f32 %v927, %v957
        %s962 = sld [smem:[#allocation4 + $0x2]]
        %s963 = sld [smem:[#allocation4 + $0x33]]
        %v964 = vstv %s962
        %v965 = vmul.f32 %v964, %v519
        %v966 = vmul.f32 %v964, %v520
        %969 = vrot.lane.b32.xlu0 %v965, 126
        %v970 = vpop.permute.xlu0 %969
        %971 = vrot.lane.b32.xlu0 %v966, 126
        %v972 = vpop.permute.xlu0 %971
        %v975 = vadd.f32 %v728, %v970
        %v976 = vadd.f32 %v729, %v972
        %v977 = vstv %s963
        %v978 = vmul.f32 %v977, %v522
        %v979 = vmul.f32 %v977, %v523
        %982 = vrot.lane.b32.xlu0 %v978, 126
        %v983 = vpop.permute.xlu0 %982
        %984 = vrot.lane.b32.xlu0 %v979, 126
        %v985 = vpop.permute.xlu0 %984
        %v988 = vadd.f32 %v744, %v983
        %v989 = vadd.f32 %v745, %v985
        %s990 = sld [smem:[#allocation4 + $0x9]]
        %s991 = sld [smem:[#allocation4 + $0x3a]]
        %v992 = vstv %s990
        %v993 = vmul.f32 %v992, %v519
        %v994 = vmul.f32 %v992, %v520
        %v995 = vmul.f32 %v992, %v521
        %v999 = vrot.slane %v993, 1
        %v1000 = vrot.slane %v994, 1
        %v1001 = vsel %vm546, %v999, %v1000
        %v1002 = vrot.slane %v995, 1
        %v1003 = vsel %vm546, %v1000, %v1002
        %1004 = vrot.lane.b32.xlu0 %v1001, 126
        %v1005 = vpop.permute.xlu0 %1004
        %1006 = vrot.lane.b32.xlu0 %v1003, 126
        %v1007 = vpop.permute.xlu0 %1006
        %v1010 = vadd.f32 %v975, %v1005
        %v1011 = vadd.f32 %v976, %v1007
        %v1012 = vstv %s991
        %v1013 = vmul.f32 %v1012, %v522
        %v1014 = vmul.f32 %v1012, %v523
        %v1015 = vmul.f32 %v1012, %v524
        %v1019 = vrot.slane %v1013, 1
        %v1020 = vrot.slane %v1014, 1
        %v1021 = vsel %vm546, %v1019, %v1020
        %v1022 = vrot.slane %v1015, 1
        %v1023 = vsel %vm546, %v1020, %v1022
        %1024 = vrot.lane.b32.xlu0 %v1021, 126
        %v1025 = vpop.permute.xlu0 %1024
        %1026 = vrot.lane.b32.xlu0 %v1023, 126
        %v1027 = vpop.permute.xlu0 %1026
        %v1030 = vadd.f32 %v988, %v1025
        %v1031 = vadd.f32 %v989, %v1027
        %s1032 = sld [smem:[#allocation4 + $0x10]]
        %s1033 = sld [smem:[#allocation4 + $0x41]]
        %v1034 = vstv %s1032
        %v1035 = vmul.f32 %v1034, %v519
        %v1036 = vmul.f32 %v1034, %v520
        %v1037 = vmul.f32 %v1034, %v521
        %v1041 = vrot.slane %v1035, 2
        %v1042 = vrot.slane %v1036, 2
        %v1043 = vsel %vm581, %v1041, %v1042
        %v1044 = vrot.slane %v1037, 2
        %v1045 = vsel %vm581, %v1042, %v1044
        %1046 = vrot.lane.b32.xlu0 %v1043, 126
        %v1047 = vpop.permute.xlu0 %1046
        %1048 = vrot.lane.b32.xlu0 %v1045, 126
        %v1049 = vpop.permute.xlu0 %1048
        %v1052 = vadd.f32 %v1010, %v1047
        %v1053 = vadd.f32 %v1011, %v1049
        %v1054 = vstv %s1033
        %v1055 = vmul.f32 %v1054, %v522
        %v1056 = vmul.f32 %v1054, %v523
        %v1057 = vmul.f32 %v1054, %v524
        %v1061 = vrot.slane %v1055, 2
        %v1062 = vrot.slane %v1056, 2
        %v1063 = vsel %vm581, %v1061, %v1062
        %v1064 = vrot.slane %v1057, 2
        %v1065 = vsel %vm581, %v1062, %v1064
        %1066 = vrot.lane.b32.xlu0 %v1063, 126
        %v1067 = vpop.permute.xlu0 %1066
        %1068 = vrot.lane.b32.xlu0 %v1065, 126
        %v1069 = vpop.permute.xlu0 %1068
        %v1072 = vadd.f32 %v1030, %v1067
        %v1073 = vadd.f32 %v1031, %v1069
        %s1074 = sld [smem:[#allocation4 + $0x17]]
        %s1075 = sld [smem:[#allocation4 + $0x48]]
        %v1076 = vstv %s1074
        %v1077 = vmul.f32 %v1076, %v519
        %v1078 = vmul.f32 %v1076, %v520
        %v1079 = vmul.f32 %v1076, %v521
        %v1083 = vrot.slane %v1077, 3
        %v1084 = vrot.slane %v1078, 3
        %v1085 = vsel %vm616, %v1083, %v1084
        %v1086 = vrot.slane %v1079, 3
        %v1087 = vsel %vm616, %v1084, %v1086
        %1088 = vrot.lane.b32.xlu0 %v1085, 126
        %v1089 = vpop.permute.xlu0 %1088
        %1090 = vrot.lane.b32.xlu0 %v1087, 126
        %v1091 = vpop.permute.xlu0 %1090
        %v1094 = vadd.f32 %v1052, %v1089
        %v1095 = vadd.f32 %v1053, %v1091
        %v1096 = vstv %s1075
        %v1097 = vmul.f32 %v1096, %v522
        %v1098 = vmul.f32 %v1096, %v523
        %v1099 = vmul.f32 %v1096, %v524
        %v1103 = vrot.slane %v1097, 3
        %v1104 = vrot.slane %v1098, 3
        %v1105 = vsel %vm616, %v1103, %v1104
        %v1106 = vrot.slane %v1099, 3
        %v1107 = vsel %vm616, %v1104, %v1106
        %1108 = vrot.lane.b32.xlu0 %v1105, 126
        %v1109 = vpop.permute.xlu0 %1108
        %1110 = vrot.lane.b32.xlu0 %v1107, 126
        %v1111 = vpop.permute.xlu0 %1110
        %v1114 = vadd.f32 %v1072, %v1109
        %v1115 = vadd.f32 %v1073, %v1111
        %s1116 = sld [smem:[#allocation4 + $0x1e]]
        %s1117 = sld [smem:[#allocation4 + $0x4f]]
        %v1118 = vstv %s1116
        %v1119 = vmul.f32 %v1118, %v519
        %v1120 = vmul.f32 %v1118, %v520
        %v1121 = vmul.f32 %v1118, %v521
        %v1125 = vrot.slane %v1119, 4
        %v1126 = vrot.slane %v1120, 4
        %v1127 = vsel %vm176, %v1125, %v1126
        %v1128 = vrot.slane %v1121, 4
        %v1129 = vsel %vm176, %v1126, %v1128
        %1130 = vrot.lane.b32.xlu0 %v1127, 126
        %v1131 = vpop.permute.xlu0 %1130
        %1132 = vrot.lane.b32.xlu0 %v1129, 126
        %v1133 = vpop.permute.xlu0 %1132
        %v1136 = vadd.f32 %v1094, %v1131
        %v1137 = vadd.f32 %v1095, %v1133
        %v1138 = vstv %s1117
        %v1139 = vmul.f32 %v1138, %v522
        %v1140 = vmul.f32 %v1138, %v523
        %v1141 = vmul.f32 %v1138, %v524
        %v1145 = vrot.slane %v1139, 4
        %v1146 = vrot.slane %v1140, 4
        %v1147 = vsel %vm176, %v1145, %v1146
        %v1148 = vrot.slane %v1141, 4
        %v1149 = vsel %vm176, %v1146, %v1148
        %1150 = vrot.lane.b32.xlu0 %v1147, 126
        %v1151 = vpop.permute.xlu0 %1150
        %1152 = vrot.lane.b32.xlu0 %v1149, 126
        %v1153 = vpop.permute.xlu0 %1152
        %v1156 = vadd.f32 %v1114, %v1151
        %v1157 = vadd.f32 %v1115, %v1153
        %s1158 = sld [smem:[#allocation4 + $0x25]]
        %s1159 = sld [smem:[#allocation4 + $0x56]]
        %v1160 = vstv %s1158
        %v1161 = vmul.f32 %v1160, %v519
        %v1162 = vmul.f32 %v1160, %v520
        %v1163 = vmul.f32 %v1160, %v521
        %v1167 = vrot.slane %v1161, 5
        %v1168 = vrot.slane %v1162, 5
        %v1169 = vsel %vm685, %v1167, %v1168
        %v1170 = vrot.slane %v1163, 5
        %v1171 = vsel %vm685, %v1168, %v1170
        %1172 = vrot.lane.b32.xlu0 %v1169, 126
        %v1173 = vpop.permute.xlu0 %1172
        %1174 = vrot.lane.b32.xlu0 %v1171, 126
        %v1175 = vpop.permute.xlu0 %1174
        %v1178 = vadd.f32 %v1136, %v1173
        %v1179 = vadd.f32 %v1137, %v1175
        %v1180 = vstv %s1159
        %v1181 = vmul.f32 %v1180, %v522
        %v1182 = vmul.f32 %v1180, %v523
        %v1183 = vmul.f32 %v1180, %v524
        %v1187 = vrot.slane %v1181, 5
        %v1188 = vrot.slane %v1182, 5
        %v1189 = vsel %vm685, %v1187, %v1188
        %v1190 = vrot.slane %v1183, 5
        %v1191 = vsel %vm685, %v1188, %v1190
        %1192 = vrot.lane.b32.xlu0 %v1189, 126
        %v1193 = vpop.permute.xlu0 %1192
        %1194 = vrot.lane.b32.xlu0 %v1191, 126
        %v1195 = vpop.permute.xlu0 %1194
        %v1198 = vadd.f32 %v1156, %v1193
        %v1199 = vadd.f32 %v1157, %v1195
        %s1200 = sld [smem:[#allocation4 + $0x2c]]
        %s1201 = sld [smem:[#allocation4 + $0x5d]]
        %v1202 = vstv %s1200
        %v1203 = vmul.f32 %v1202, %v519
        %v1204 = vmul.f32 %v1202, %v520
        %v1205 = vmul.f32 %v1202, %v521
        %v1209 = vrot.slane %v1203, 6
        %v1210 = vrot.slane %v1204, 6
        %v1211 = vsel %vm720, %v1209, %v1210
        %v1212 = vrot.slane %v1205, 6
        %v1213 = vsel %vm720, %v1210, %v1212
        %1214 = vrot.lane.b32.xlu0 %v1211, 126
        %v1215 = vpop.permute.xlu0 %1214
        %1216 = vrot.lane.b32.xlu0 %v1213, 126
        %v1217 = vpop.permute.xlu0 %1216
        %v1220 = vadd.f32 %v1178, %v1215
        %v1221 = vadd.f32 %v1179, %v1217
        %v1222 = vstv %s1201
        %v1223 = vmul.f32 %v1222, %v522
        %v1224 = vmul.f32 %v1222, %v523
        %v1225 = vmul.f32 %v1222, %v524
        %v1229 = vrot.slane %v1223, 6
        %v1230 = vrot.slane %v1224, 6
        %v1231 = vsel %vm720, %v1229, %v1230
        %v1232 = vrot.slane %v1225, 6
        %v1233 = vsel %vm720, %v1230, %v1232
        %1234 = vrot.lane.b32.xlu0 %v1231, 126
        %v1235 = vpop.permute.xlu0 %1234
        %1236 = vrot.lane.b32.xlu0 %v1233, 126
        %v1237 = vpop.permute.xlu0 %1236
        %v1240 = vadd.f32 %v1198, %v1235
        %v1241 = vadd.f32 %v1199, %v1237
        %s1242 = sld [smem:[#allocation4 + $0x3]]
        %s1243 = sld [smem:[#allocation4 + $0x34]]
        %v1244 = vstv %s1242
        %v1245 = vmul.f32 %v1244, %v519
        %v1246 = vmul.f32 %v1244, %v520
        %1249 = vrot.lane.b32.xlu0 %v1245, 126
        %v1250 = vpop.permute.xlu0 %1249
        %1251 = vrot.lane.b32.xlu0 %v1246, 126
        %v1252 = vpop.permute.xlu0 %1251
        %v1255 = vadd.f32 %v944, %v1250
        %v1256 = vadd.f32 %v945, %v1252
        %v1257 = vstv %s1243
        %v1258 = vmul.f32 %v1257, %v522
        %v1259 = vmul.f32 %v1257, %v523
        %1262 = vrot.lane.b32.xlu0 %v1258, 126
        %v1263 = vpop.permute.xlu0 %1262
        %1264 = vrot.lane.b32.xlu0 %v1259, 126
        %v1265 = vpop.permute.xlu0 %1264
        %v1268 = vadd.f32 %v960, %v1263
        %v1269 = vadd.f32 %v961, %v1265
        %s1270 = sld [smem:[#allocation4 + $0xa]]
        %s1271 = sld [smem:[#allocation4 + $0x3b]]
        %v1272 = vstv %s1270
        %v1273 = vmul.f32 %v1272, %v519
        %v1274 = vmul.f32 %v1272, %v520
        %v1275 = vmul.f32 %v1272, %v521
        %v1279 = vrot.slane %v1273, 1
        %v1280 = vrot.slane %v1274, 1
        %v1281 = vsel %vm546, %v1279, %v1280
        %v1282 = vrot.slane %v1275, 1
        %v1283 = vsel %vm546, %v1280, %v1282
        %1284 = vrot.lane.b32.xlu0 %v1281, 126
        %v1285 = vpop.permute.xlu0 %1284
        %1286 = vrot.lane.b32.xlu0 %v1283, 126
        %v1287 = vpop.permute.xlu0 %1286
        %v1290 = vadd.f32 %v1255, %v1285
        %v1291 = vadd.f32 %v1256, %v1287
        %v1292 = vstv %s1271
        %v1293 = vmul.f32 %v1292, %v522
        %v1294 = vmul.f32 %v1292, %v523
        %v1295 = vmul.f32 %v1292, %v524
        %v1299 = vrot.slane %v1293, 1
        %v1300 = vrot.slane %v1294, 1
        %v1301 = vsel %vm546, %v1299, %v1300
        %v1302 = vrot.slane %v1295, 1
        %v1303 = vsel %vm546, %v1300, %v1302
        %1304 = vrot.lane.b32.xlu0 %v1301, 126
        %v1305 = vpop.permute.xlu0 %1304
        %1306 = vrot.lane.b32.xlu0 %v1303, 126
        %v1307 = vpop.permute.xlu0 %1306
        %v1310 = vadd.f32 %v1268, %v1305
        %v1311 = vadd.f32 %v1269, %v1307
        %s1312 = sld [smem:[#allocation4 + $0x11]]
        %s1313 = sld [smem:[#allocation4 + $0x42]]
        %v1314 = vstv %s1312
        %v1315 = vmul.f32 %v1314, %v519
        %v1316 = vmul.f32 %v1314, %v520
        %v1317 = vmul.f32 %v1314, %v521
        %v1321 = vrot.slane %v1315, 2
        %v1322 = vrot.slane %v1316, 2
        %v1323 = vsel %vm581, %v1321, %v1322
        %v1324 = vrot.slane %v1317, 2
        %v1325 = vsel %vm581, %v1322, %v1324
        %1326 = vrot.lane.b32.xlu0 %v1323, 126
        %v1327 = vpop.permute.xlu0 %1326
        %1328 = vrot.lane.b32.xlu0 %v1325, 126
        %v1329 = vpop.permute.xlu0 %1328
        %v1332 = vadd.f32 %v1290, %v1327
        %v1333 = vadd.f32 %v1291, %v1329
        %v1334 = vstv %s1313
        %v1335 = vmul.f32 %v1334, %v522
        %v1336 = vmul.f32 %v1334, %v523
        %v1337 = vmul.f32 %v1334, %v524
        %v1341 = vrot.slane %v1335, 2
        %v1342 = vrot.slane %v1336, 2
        %v1343 = vsel %vm581, %v1341, %v1342
        %v1344 = vrot.slane %v1337, 2
        %v1345 = vsel %vm581, %v1342, %v1344
        %1346 = vrot.lane.b32.xlu0 %v1343, 126
        %v1347 = vpop.permute.xlu0 %1346
        %1348 = vrot.lane.b32.xlu0 %v1345, 126
        %v1349 = vpop.permute.xlu0 %1348
        %v1352 = vadd.f32 %v1310, %v1347
        %v1353 = vadd.f32 %v1311, %v1349
        %s1354 = sld [smem:[#allocation4 + $0x18]]
        %s1355 = sld [smem:[#allocation4 + $0x49]]
        %v1356 = vstv %s1354
        %v1357 = vmul.f32 %v1356, %v519
        %v1358 = vmul.f32 %v1356, %v520
        %v1359 = vmul.f32 %v1356, %v521
        %v1363 = vrot.slane %v1357, 3
        %v1364 = vrot.slane %v1358, 3
        %v1365 = vsel %vm616, %v1363, %v1364
        %v1366 = vrot.slane %v1359, 3
        %v1367 = vsel %vm616, %v1364, %v1366
        %1368 = vrot.lane.b32.xlu0 %v1365, 126
        %v1369 = vpop.permute.xlu0 %1368
        %1370 = vrot.lane.b32.xlu0 %v1367, 126
        %v1371 = vpop.permute.xlu0 %1370
        %v1374 = vadd.f32 %v1332, %v1369
        %v1375 = vadd.f32 %v1333, %v1371
        %v1376 = vstv %s1355
        %v1377 = vmul.f32 %v1376, %v522
        %v1378 = vmul.f32 %v1376, %v523
        %v1379 = vmul.f32 %v1376, %v524
        %v1383 = vrot.slane %v1377, 3
        %v1384 = vrot.slane %v1378, 3
        %v1385 = vsel %vm616, %v1383, %v1384
        %v1386 = vrot.slane %v1379, 3
        %v1387 = vsel %vm616, %v1384, %v1386
        %1388 = vrot.lane.b32.xlu0 %v1385, 126
        %v1389 = vpop.permute.xlu0 %1388
        %1390 = vrot.lane.b32.xlu0 %v1387, 126
        %v1391 = vpop.permute.xlu0 %1390
        %v1394 = vadd.f32 %v1352, %v1389
        %v1395 = vadd.f32 %v1353, %v1391
        %s1396 = sld [smem:[#allocation4 + $0x1f]]
        %s1397 = sld [smem:[#allocation4 + $0x50]]
        %v1398 = vstv %s1396
        %v1399 = vmul.f32 %v1398, %v519
        %v1400 = vmul.f32 %v1398, %v520
        %v1401 = vmul.f32 %v1398, %v521
        %v1405 = vrot.slane %v1399, 4
        %v1406 = vrot.slane %v1400, 4
        %v1407 = vsel %vm176, %v1405, %v1406
        %v1408 = vrot.slane %v1401, 4
        %v1409 = vsel %vm176, %v1406, %v1408
        %1410 = vrot.lane.b32.xlu0 %v1407, 126
        %v1411 = vpop.permute.xlu0 %1410
        %1412 = vrot.lane.b32.xlu0 %v1409, 126
        %v1413 = vpop.permute.xlu0 %1412
        %v1416 = vadd.f32 %v1374, %v1411
        %v1417 = vadd.f32 %v1375, %v1413
        %v1418 = vstv %s1397
        %v1419 = vmul.f32 %v1418, %v522
        %v1420 = vmul.f32 %v1418, %v523
        %v1421 = vmul.f32 %v1418, %v524
        %v1425 = vrot.slane %v1419, 4
        %v1426 = vrot.slane %v1420, 4
        %v1427 = vsel %vm176, %v1425, %v1426
        %v1428 = vrot.slane %v1421, 4
        %v1429 = vsel %vm176, %v1426, %v1428
        %1430 = vrot.lane.b32.xlu0 %v1427, 126
        %v1431 = vpop.permute.xlu0 %1430
        %1432 = vrot.lane.b32.xlu0 %v1429, 126
        %v1433 = vpop.permute.xlu0 %1432
        %v1436 = vadd.f32 %v1394, %v1431
        %v1437 = vadd.f32 %v1395, %v1433
        %s1438 = sld [smem:[#allocation4 + $0x26]]
        %s1439 = sld [smem:[#allocation4 + $0x57]]
        %v1440 = vstv %s1438
        %v1441 = vmul.f32 %v1440, %v519
        %v1442 = vmul.f32 %v1440, %v520
        %v1443 = vmul.f32 %v1440, %v521
        %v1447 = vrot.slane %v1441, 5
        %v1448 = vrot.slane %v1442, 5
        %v1449 = vsel %vm685, %v1447, %v1448
        %v1450 = vrot.slane %v1443, 5
        %v1451 = vsel %vm685, %v1448, %v1450
        %1452 = vrot.lane.b32.xlu0 %v1449, 126
        %v1453 = vpop.permute.xlu0 %1452
        %1454 = vrot.lane.b32.xlu0 %v1451, 126
        %v1455 = vpop.permute.xlu0 %1454
        %v1458 = vadd.f32 %v1416, %v1453
        %v1459 = vadd.f32 %v1417, %v1455
        %v1460 = vstv %s1439
        %v1461 = vmul.f32 %v1460, %v522
        %v1462 = vmul.f32 %v1460, %v523
        %v1463 = vmul.f32 %v1460, %v524
        %v1467 = vrot.slane %v1461, 5
        %v1468 = vrot.slane %v1462, 5
        %v1469 = vsel %vm685, %v1467, %v1468
        %v1470 = vrot.slane %v1463, 5
        %v1471 = vsel %vm685, %v1468, %v1470
        %1472 = vrot.lane.b32.xlu0 %v1469, 126
        %v1473 = vpop.permute.xlu0 %1472
        %1474 = vrot.lane.b32.xlu0 %v1471, 126
        %v1475 = vpop.permute.xlu0 %1474
        %v1478 = vadd.f32 %v1436, %v1473
        %v1479 = vadd.f32 %v1437, %v1475
        %s1480 = sld [smem:[#allocation4 + $0x2d]]
        %s1481 = sld [smem:[#allocation4 + $0x5e]]
        %v1482 = vstv %s1480
        %v1483 = vmul.f32 %v1482, %v519
        %v1484 = vmul.f32 %v1482, %v520
        %v1485 = vmul.f32 %v1482, %v521
        %v1489 = vrot.slane %v1483, 6
        %v1490 = vrot.slane %v1484, 6
        %v1491 = vsel %vm720, %v1489, %v1490
        %v1492 = vrot.slane %v1485, 6
        %v1493 = vsel %vm720, %v1490, %v1492
        %1494 = vrot.lane.b32.xlu0 %v1491, 126
        %v1495 = vpop.permute.xlu0 %1494
        %1496 = vrot.lane.b32.xlu0 %v1493, 126
        %v1497 = vpop.permute.xlu0 %1496
        %v1500 = vadd.f32 %v1458, %v1495
        %v1501 = vadd.f32 %v1459, %v1497
        %v1502 = vstv %s1481
        %v1503 = vmul.f32 %v1502, %v522
        %v1504 = vmul.f32 %v1502, %v523
        %v1505 = vmul.f32 %v1502, %v524
        %v1509 = vrot.slane %v1503, 6
        %v1510 = vrot.slane %v1504, 6
        %v1511 = vsel %vm720, %v1509, %v1510
        %v1512 = vrot.slane %v1505, 6
        %v1513 = vsel %vm720, %v1510, %v1512
        %1514 = vrot.lane.b32.xlu0 %v1511, 126
        %v1515 = vpop.permute.xlu0 %1514
        %1516 = vrot.lane.b32.xlu0 %v1513, 126
        %v1517 = vpop.permute.xlu0 %1516
        %v1520 = vadd.f32 %v1478, %v1515
        %v1521 = vadd.f32 %v1479, %v1517
        %s1522 = sld [smem:[#allocation4 + $0x4]]
        %s1523 = sld [smem:[#allocation4 + $0x35]]
        %v1524 = vstv %s1522
        %v1525 = vmul.f32 %v1524, %v519
        %v1526 = vmul.f32 %v1524, %v520
        %1529 = vrot.lane.b32.xlu0 %v1525, 124
        %v1530 = vpop.permute.xlu0 %1529
        %1531 = vrot.lane.b32.xlu0 %v1526, 124
        %v1532 = vpop.permute.xlu0 %1531
        %v1535 = vadd.f32 %v1220, %v1530
        %v1536 = vadd.f32 %v1221, %v1532
        %v1537 = vstv %s1523
        %v1538 = vmul.f32 %v1537, %v522
        %v1539 = vmul.f32 %v1537, %v523
        %1542 = vrot.lane.b32.xlu0 %v1538, 124
        %v1543 = vpop.permute.xlu0 %1542
        %1544 = vrot.lane.b32.xlu0 %v1539, 124
        %v1545 = vpop.permute.xlu0 %1544
        %v1548 = vadd.f32 %v1240, %v1543
        %v1549 = vadd.f32 %v1241, %v1545
        %s1550 = sld [smem:[#allocation4 + $0xb]]
        %s1551 = sld [smem:[#allocation4 + $0x3c]]
        %v1552 = vstv %s1550
        %v1553 = vmul.f32 %v1552, %v519
        %v1554 = vmul.f32 %v1552, %v520
        %v1555 = vmul.f32 %v1552, %v521
        %v1559 = vrot.slane %v1553, 1
        %v1560 = vrot.slane %v1554, 1
        %v1561 = vsel %vm546, %v1559, %v1560
        %v1562 = vrot.slane %v1555, 1
        %v1563 = vsel %vm546, %v1560, %v1562
        %1564 = vrot.lane.b32.xlu0 %v1561, 124
        %v1565 = vpop.permute.xlu0 %1564
        %1566 = vrot.lane.b32.xlu0 %v1563, 124
        %v1567 = vpop.permute.xlu0 %1566
        %v1570 = vadd.f32 %v1535, %v1565
        %v1571 = vadd.f32 %v1536, %v1567
        %v1572 = vstv %s1551
        %v1573 = vmul.f32 %v1572, %v522
        %v1574 = vmul.f32 %v1572, %v523
        %v1575 = vmul.f32 %v1572, %v524
        %v1579 = vrot.slane %v1573, 1
        %v1580 = vrot.slane %v1574, 1
        %v1581 = vsel %vm546, %v1579, %v1580
        %v1582 = vrot.slane %v1575, 1
        %v1583 = vsel %vm546, %v1580, %v1582
        %1584 = vrot.lane.b32.xlu0 %v1581, 124
        %v1585 = vpop.permute.xlu0 %1584
        %1586 = vrot.lane.b32.xlu0 %v1583, 124
        %v1587 = vpop.permute.xlu0 %1586
        %v1590 = vadd.f32 %v1548, %v1585
        %v1591 = vadd.f32 %v1549, %v1587
        %s1592 = sld [smem:[#allocation4 + $0x12]]
        %s1593 = sld [smem:[#allocation4 + $0x43]]
        %v1594 = vstv %s1592
        %v1595 = vmul.f32 %v1594, %v519
        %v1596 = vmul.f32 %v1594, %v520
        %v1597 = vmul.f32 %v1594, %v521
        %v1601 = vrot.slane %v1595, 2
        %v1602 = vrot.slane %v1596, 2
        %v1603 = vsel %vm581, %v1601, %v1602
        %v1604 = vrot.slane %v1597, 2
        %v1605 = vsel %vm581, %v1602, %v1604
        %1606 = vrot.lane.b32.xlu0 %v1603, 124
        %v1607 = vpop.permute.xlu0 %1606
        %1608 = vrot.lane.b32.xlu0 %v1605, 124
        %v1609 = vpop.permute.xlu0 %1608
        %v1612 = vadd.f32 %v1570, %v1607
        %v1613 = vadd.f32 %v1571, %v1609
        %v1614 = vstv %s1593
        %v1615 = vmul.f32 %v1614, %v522
        %v1616 = vmul.f32 %v1614, %v523
        %v1617 = vmul.f32 %v1614, %v524
        %v1621 = vrot.slane %v1615, 2
        %v1622 = vrot.slane %v1616, 2
        %v1623 = vsel %vm581, %v1621, %v1622
        %v1624 = vrot.slane %v1617, 2
        %v1625 = vsel %vm581, %v1622, %v1624
        %1626 = vrot.lane.b32.xlu0 %v1623, 124
        %v1627 = vpop.permute.xlu0 %1626
        %1628 = vrot.lane.b32.xlu0 %v1625, 124
        %v1629 = vpop.permute.xlu0 %1628
        %v1632 = vadd.f32 %v1590, %v1627
        %v1633 = vadd.f32 %v1591, %v1629
        %s1634 = sld [smem:[#allocation4 + $0x19]]
        %s1635 = sld [smem:[#allocation4 + $0x4a]]
        %v1636 = vstv %s1634
        %v1637 = vmul.f32 %v1636, %v519
        %v1638 = vmul.f32 %v1636, %v520
        %v1639 = vmul.f32 %v1636, %v521
        %v1643 = vrot.slane %v1637, 3
        %v1644 = vrot.slane %v1638, 3
        %v1645 = vsel %vm616, %v1643, %v1644
        %v1646 = vrot.slane %v1639, 3
        %v1647 = vsel %vm616, %v1644, %v1646
        %1648 = vrot.lane.b32.xlu0 %v1645, 124
        %v1649 = vpop.permute.xlu0 %1648
        %1650 = vrot.lane.b32.xlu0 %v1647, 124
        %v1651 = vpop.permute.xlu0 %1650
        %v1654 = vadd.f32 %v1612, %v1649
        %v1655 = vadd.f32 %v1613, %v1651
        %v1656 = vstv %s1635
        %v1657 = vmul.f32 %v1656, %v522
        %v1658 = vmul.f32 %v1656, %v523
        %v1659 = vmul.f32 %v1656, %v524
        %v1663 = vrot.slane %v1657, 3
        %v1664 = vrot.slane %v1658, 3
        %v1665 = vsel %vm616, %v1663, %v1664
        %v1666 = vrot.slane %v1659, 3
        %v1667 = vsel %vm616, %v1664, %v1666
        %1668 = vrot.lane.b32.xlu0 %v1665, 124
        %v1669 = vpop.permute.xlu0 %1668
        %1670 = vrot.lane.b32.xlu0 %v1667, 124
        %v1671 = vpop.permute.xlu0 %1670
        %v1674 = vadd.f32 %v1632, %v1669
        %v1675 = vadd.f32 %v1633, %v1671
        %s1676 = sld [smem:[#allocation4 + $0x20]]
        %s1677 = sld [smem:[#allocation4 + $0x51]]
        %v1678 = vstv %s1676
        %v1679 = vmul.f32 %v1678, %v519
        %v1680 = vmul.f32 %v1678, %v520
        %v1681 = vmul.f32 %v1678, %v521
        %v1685 = vrot.slane %v1679, 4
        %v1686 = vrot.slane %v1680, 4
        %v1687 = vsel %vm176, %v1685, %v1686
        %v1688 = vrot.slane %v1681, 4
        %v1689 = vsel %vm176, %v1686, %v1688
        %1690 = vrot.lane.b32.xlu0 %v1687, 124
        %v1691 = vpop.permute.xlu0 %1690
        %1692 = vrot.lane.b32.xlu0 %v1689, 124
        %v1693 = vpop.permute.xlu0 %1692
        %v1696 = vadd.f32 %v1654, %v1691
        %v1697 = vadd.f32 %v1655, %v1693
        %v1698 = vstv %s1677
        %v1699 = vmul.f32 %v1698, %v522
        %v1700 = vmul.f32 %v1698, %v523
        %v1701 = vmul.f32 %v1698, %v524
        %v1705 = vrot.slane %v1699, 4
        %v1706 = vrot.slane %v1700, 4
        %v1707 = vsel %vm176, %v1705, %v1706
        %v1708 = vrot.slane %v1701, 4
        %v1709 = vsel %vm176, %v1706, %v1708
        %1710 = vrot.lane.b32.xlu0 %v1707, 124
        %v1711 = vpop.permute.xlu0 %1710
        %1712 = vrot.lane.b32.xlu0 %v1709, 124
        %v1713 = vpop.permute.xlu0 %1712
        %v1716 = vadd.f32 %v1674, %v1711
        %v1717 = vadd.f32 %v1675, %v1713
        %s1718 = sld [smem:[#allocation4 + $0x27]]
        %s1719 = sld [smem:[#allocation4 + $0x58]]
        %v1720 = vstv %s1718
        %v1721 = vmul.f32 %v1720, %v519
        %v1722 = vmul.f32 %v1720, %v520
        %v1723 = vmul.f32 %v1720, %v521
        %v1727 = vrot.slane %v1721, 5
        %v1728 = vrot.slane %v1722, 5
        %v1729 = vsel %vm685, %v1727, %v1728
        %v1730 = vrot.slane %v1723, 5
        %v1731 = vsel %vm685, %v1728, %v1730
        %1732 = vrot.lane.b32.xlu0 %v1729, 124
        %v1733 = vpop.permute.xlu0 %1732
        %1734 = vrot.lane.b32.xlu0 %v1731, 124
        %v1735 = vpop.permute.xlu0 %1734
        %v1738 = vadd.f32 %v1696, %v1733
        %v1739 = vadd.f32 %v1697, %v1735
        %v1740 = vstv %s1719
        %v1741 = vmul.f32 %v1740, %v522
        %v1742 = vmul.f32 %v1740, %v523
        %v1743 = vmul.f32 %v1740, %v524
        %v1747 = vrot.slane %v1741, 5
        %v1748 = vrot.slane %v1742, 5
        %v1749 = vsel %vm685, %v1747, %v1748
        %v1750 = vrot.slane %v1743, 5
        %v1751 = vsel %vm685, %v1748, %v1750
        %1752 = vrot.lane.b32.xlu0 %v1749, 124
        %v1753 = vpop.permute.xlu0 %1752
        %1754 = vrot.lane.b32.xlu0 %v1751, 124
        %v1755 = vpop.permute.xlu0 %1754
        %v1758 = vadd.f32 %v1716, %v1753
        %v1759 = vadd.f32 %v1717, %v1755
        %s1760 = sld [smem:[#allocation4 + $0x2e]]
        %s1761 = sld [smem:[#allocation4 + $0x5f]]
        %v1762 = vstv %s1760
        %v1763 = vmul.f32 %v1762, %v519
        %v1764 = vmul.f32 %v1762, %v520
        %v1765 = vmul.f32 %v1762, %v521
        %v1769 = vrot.slane %v1763, 6
        %v1770 = vrot.slane %v1764, 6
        %v1771 = vsel %vm720, %v1769, %v1770
        %v1772 = vrot.slane %v1765, 6
        %v1773 = vsel %vm720, %v1770, %v1772
        %1774 = vrot.lane.b32.xlu0 %v1771, 124
        %v1775 = vpop.permute.xlu0 %1774
        %1776 = vrot.lane.b32.xlu0 %v1773, 124
        %v1777 = vpop.permute.xlu0 %1776
        %v1780 = vadd.f32 %v1738, %v1775
        %v1781 = vadd.f32 %v1739, %v1777
        %v1782 = vstv %s1761
        %v1783 = vmul.f32 %v1782, %v522
        %v1784 = vmul.f32 %v1782, %v523
        %v1785 = vmul.f32 %v1782, %v524
        %v1789 = vrot.slane %v1783, 6
        %v1790 = vrot.slane %v1784, 6
        %v1791 = vsel %vm720, %v1789, %v1790
        %v1792 = vrot.slane %v1785, 6
        %v1793 = vsel %vm720, %v1790, %v1792
        %1794 = vrot.lane.b32.xlu0 %v1791, 124
        %v1795 = vpop.permute.xlu0 %1794
        %1796 = vrot.lane.b32.xlu0 %v1793, 124
        %v1797 = vpop.permute.xlu0 %1796
        %v1800 = vadd.f32 %v1758, %v1795
        %v1801 = vadd.f32 %v1759, %v1797
        %s1802 = sld [smem:[#allocation4 + $0x5]]
        %s1803 = sld [smem:[#allocation4 + $0x36]]
        %v1804 = vstv %s1802
        %v1805 = vmul.f32 %v1804, %v519
        %v1806 = vmul.f32 %v1804, %v520
        %1809 = vrot.lane.b32.xlu0 %v1805, 124
        %v1810 = vpop.permute.xlu0 %1809
        %1811 = vrot.lane.b32.xlu0 %v1806, 124
        %v1812 = vpop.permute.xlu0 %1811
        %v1815 = vadd.f32 %v1500, %v1810
        %v1816 = vadd.f32 %v1501, %v1812
        %v1817 = vstv %s1803
        %v1818 = vmul.f32 %v1817, %v522
        %v1819 = vmul.f32 %v1817, %v523
        %1822 = vrot.lane.b32.xlu0 %v1818, 124
        %v1823 = vpop.permute.xlu0 %1822
        %1824 = vrot.lane.b32.xlu0 %v1819, 124
        %v1825 = vpop.permute.xlu0 %1824
        %v1828 = vadd.f32 %v1520, %v1823
        %v1829 = vadd.f32 %v1521, %v1825
        %s1830 = sld [smem:[#allocation4 + $0xc]]
        %s1831 = sld [smem:[#allocation4 + $0x3d]]
        %v1832 = vstv %s1830
        %v1833 = vmul.f32 %v1832, %v519
        %v1834 = vmul.f32 %v1832, %v520
        %v1835 = vmul.f32 %v1832, %v521
        %v1839 = vrot.slane %v1833, 1
        %v1840 = vrot.slane %v1834, 1
        %v1841 = vsel %vm546, %v1839, %v1840
        %v1842 = vrot.slane %v1835, 1
        %v1843 = vsel %vm546, %v1840, %v1842
        %1844 = vrot.lane.b32.xlu0 %v1841, 124
        %v1845 = vpop.permute.xlu0 %1844
        %1846 = vrot.lane.b32.xlu0 %v1843, 124
        %v1847 = vpop.permute.xlu0 %1846
        %v1850 = vadd.f32 %v1815, %v1845
        %v1851 = vadd.f32 %v1816, %v1847
        %v1852 = vstv %s1831
        %v1853 = vmul.f32 %v1852, %v522
        %v1854 = vmul.f32 %v1852, %v523
        %v1855 = vmul.f32 %v1852, %v524
        %v1859 = vrot.slane %v1853, 1
        %v1860 = vrot.slane %v1854, 1
        %v1861 = vsel %vm546, %v1859, %v1860
        %v1862 = vrot.slane %v1855, 1
        %v1863 = vsel %vm546, %v1860, %v1862
        %1864 = vrot.lane.b32.xlu0 %v1861, 124
        %v1865 = vpop.permute.xlu0 %1864
        %1866 = vrot.lane.b32.xlu0 %v1863, 124
        %v1867 = vpop.permute.xlu0 %1866
        %v1870 = vadd.f32 %v1828, %v1865
        %v1871 = vadd.f32 %v1829, %v1867
        %s1872 = sld [smem:[#allocation4 + $0x13]]
        %s1873 = sld [smem:[#allocation4 + $0x44]]
        %v1874 = vstv %s1872
        %v1875 = vmul.f32 %v1874, %v519
        %v1876 = vmul.f32 %v1874, %v520
        %v1877 = vmul.f32 %v1874, %v521
        %v1881 = vrot.slane %v1875, 2
        %v1882 = vrot.slane %v1876, 2
        %v1883 = vsel %vm581, %v1881, %v1882
        %v1884 = vrot.slane %v1877, 2
        %v1885 = vsel %vm581, %v1882, %v1884
        %1886 = vrot.lane.b32.xlu0 %v1883, 124
        %v1887 = vpop.permute.xlu0 %1886
        %1888 = vrot.lane.b32.xlu0 %v1885, 124
        %v1889 = vpop.permute.xlu0 %1888
        %v1892 = vadd.f32 %v1850, %v1887
        %v1893 = vadd.f32 %v1851, %v1889
        %v1894 = vstv %s1873
        %v1895 = vmul.f32 %v1894, %v522
        %v1896 = vmul.f32 %v1894, %v523
        %v1897 = vmul.f32 %v1894, %v524
        %v1901 = vrot.slane %v1895, 2
        %v1902 = vrot.slane %v1896, 2
        %v1903 = vsel %vm581, %v1901, %v1902
        %v1904 = vrot.slane %v1897, 2
        %v1905 = vsel %vm581, %v1902, %v1904
        %1906 = vrot.lane.b32.xlu0 %v1903, 124
        %v1907 = vpop.permute.xlu0 %1906
        %1908 = vrot.lane.b32.xlu0 %v1905, 124
        %v1909 = vpop.permute.xlu0 %1908
        %v1912 = vadd.f32 %v1870, %v1907
        %v1913 = vadd.f32 %v1871, %v1909
        %s1914 = sld [smem:[#allocation4 + $0x1a]]
        %s1915 = sld [smem:[#allocation4 + $0x4b]]
        %v1916 = vstv %s1914
        %v1917 = vmul.f32 %v1916, %v519
        %v1918 = vmul.f32 %v1916, %v520
        %v1919 = vmul.f32 %v1916, %v521
        %v1923 = vrot.slane %v1917, 3
        %v1924 = vrot.slane %v1918, 3
        %v1925 = vsel %vm616, %v1923, %v1924
        %v1926 = vrot.slane %v1919, 3
        %v1927 = vsel %vm616, %v1924, %v1926
        %1928 = vrot.lane.b32.xlu0 %v1925, 124
        %v1929 = vpop.permute.xlu0 %1928
        %1930 = vrot.lane.b32.xlu0 %v1927, 124
        %v1931 = vpop.permute.xlu0 %1930
        %v1934 = vadd.f32 %v1892, %v1929
        %v1935 = vadd.f32 %v1893, %v1931
        %v1936 = vstv %s1915
        %v1937 = vmul.f32 %v1936, %v522
        %v1938 = vmul.f32 %v1936, %v523
        %v1939 = vmul.f32 %v1936, %v524
        %v1943 = vrot.slane %v1937, 3
        %v1944 = vrot.slane %v1938, 3
        %v1945 = vsel %vm616, %v1943, %v1944
        %v1946 = vrot.slane %v1939, 3
        %v1947 = vsel %vm616, %v1944, %v1946
        %1948 = vrot.lane.b32.xlu0 %v1945, 124
        %v1949 = vpop.permute.xlu0 %1948
        %1950 = vrot.lane.b32.xlu0 %v1947, 124
        %v1951 = vpop.permute.xlu0 %1950
        %v1954 = vadd.f32 %v1912, %v1949
        %v1955 = vadd.f32 %v1913, %v1951
        %s1956 = sld [smem:[#allocation4 + $0x21]]
        %s1957 = sld [smem:[#allocation4 + $0x52]]
        %v1958 = vstv %s1956
        %v1959 = vmul.f32 %v1958, %v519
        %v1960 = vmul.f32 %v1958, %v520
        %v1961 = vmul.f32 %v1958, %v521
        %v1965 = vrot.slane %v1959, 4
        %v1966 = vrot.slane %v1960, 4
        %v1967 = vsel %vm176, %v1965, %v1966
        %v1968 = vrot.slane %v1961, 4
        %v1969 = vsel %vm176, %v1966, %v1968
        %1970 = vrot.lane.b32.xlu0 %v1967, 124
        %v1971 = vpop.permute.xlu0 %1970
        %1972 = vrot.lane.b32.xlu0 %v1969, 124
        %v1973 = vpop.permute.xlu0 %1972
        %v1976 = vadd.f32 %v1934, %v1971
        %v1977 = vadd.f32 %v1935, %v1973
        %v1978 = vstv %s1957
        %v1979 = vmul.f32 %v1978, %v522
        %v1980 = vmul.f32 %v1978, %v523
        %v1981 = vmul.f32 %v1978, %v524
        %v1985 = vrot.slane %v1979, 4
        %v1986 = vrot.slane %v1980, 4
        %v1987 = vsel %vm176, %v1985, %v1986
        %v1988 = vrot.slane %v1981, 4
        %v1989 = vsel %vm176, %v1986, %v1988
        %1990 = vrot.lane.b32.xlu0 %v1987, 124
        %v1991 = vpop.permute.xlu0 %1990
        %1992 = vrot.lane.b32.xlu0 %v1989, 124
        %v1993 = vpop.permute.xlu0 %1992
        %v1996 = vadd.f32 %v1954, %v1991
        %v1997 = vadd.f32 %v1955, %v1993
        %s1998 = sld [smem:[#allocation4 + $0x28]]
        %s1999 = sld [smem:[#allocation4 + $0x59]]
        %v2000 = vstv %s1998
        %v2001 = vmul.f32 %v2000, %v519
        %v2002 = vmul.f32 %v2000, %v520
        %v2003 = vmul.f32 %v2000, %v521
        %v2007 = vrot.slane %v2001, 5
        %v2008 = vrot.slane %v2002, 5
        %v2009 = vsel %vm685, %v2007, %v2008
        %v2010 = vrot.slane %v2003, 5
        %v2011 = vsel %vm685, %v2008, %v2010
        %2012 = vrot.lane.b32.xlu0 %v2009, 124
        %v2013 = vpop.permute.xlu0 %2012
        %2014 = vrot.lane.b32.xlu0 %v2011, 124
        %v2015 = vpop.permute.xlu0 %2014
        %v2018 = vadd.f32 %v1976, %v2013
        %v2019 = vadd.f32 %v1977, %v2015
        %v2020 = vstv %s1999
        %v2021 = vmul.f32 %v2020, %v522
        %v2022 = vmul.f32 %v2020, %v523
        %v2023 = vmul.f32 %v2020, %v524
        %v2027 = vrot.slane %v2021, 5
        %v2028 = vrot.slane %v2022, 5
        %v2029 = vsel %vm685, %v2027, %v2028
        %v2030 = vrot.slane %v2023, 5
        %v2031 = vsel %vm685, %v2028, %v2030
        %2032 = vrot.lane.b32.xlu0 %v2029, 124
        %v2033 = vpop.permute.xlu0 %2032
        %2034 = vrot.lane.b32.xlu0 %v2031, 124
        %v2035 = vpop.permute.xlu0 %2034
        %v2038 = vadd.f32 %v1996, %v2033
        %v2039 = vadd.f32 %v1997, %v2035
        %s2040 = sld [smem:[#allocation4 + $0x2f]]
        %s2041 = sld [smem:[#allocation4 + $0x60]]
        %v2042 = vstv %s2040
        %v2043 = vmul.f32 %v2042, %v519
        %v2044 = vmul.f32 %v2042, %v520
        %v2045 = vmul.f32 %v2042, %v521
        %v2049 = vrot.slane %v2043, 6
        %v2050 = vrot.slane %v2044, 6
        %v2051 = vsel %vm720, %v2049, %v2050
        %v2052 = vrot.slane %v2045, 6
        %v2053 = vsel %vm720, %v2050, %v2052
        %2054 = vrot.lane.b32.xlu0 %v2051, 124
        %v2055 = vpop.permute.xlu0 %2054
        %2056 = vrot.lane.b32.xlu0 %v2053, 124
        %v2057 = vpop.permute.xlu0 %2056
        %v2060 = vadd.f32 %v2018, %v2055
        %v2061 = vadd.f32 %v2019, %v2057
        %v2062 = vstv %s2041
        %v2063 = vmul.f32 %v2062, %v522
        %v2064 = vmul.f32 %v2062, %v523
        %v2065 = vmul.f32 %v2062, %v524
        %v2069 = vrot.slane %v2063, 6
        %v2070 = vrot.slane %v2064, 6
        %v2071 = vsel %vm720, %v2069, %v2070
        %v2072 = vrot.slane %v2065, 6
        %v2073 = vsel %vm720, %v2070, %v2072
        %2074 = vrot.lane.b32.xlu0 %v2071, 124
        %v2075 = vpop.permute.xlu0 %2074
        %2076 = vrot.lane.b32.xlu0 %v2073, 124
        %v2077 = vpop.permute.xlu0 %2076
        %v2080 = vadd.f32 %v2038, %v2075
        %v2081 = vadd.f32 %v2039, %v2077
        %s2082 = sld [smem:[#allocation4 + $0x6]]
        %s2083 = sld [smem:[#allocation4 + $0x37]]
        %v2084 = vstv %s2082
        %v2085 = vmul.f32 %v2084, %v519
        %v2086 = vmul.f32 %v2084, %v520
        %2089 = vrot.lane.b32.xlu0 %v2085, 122
        %v2090 = vpop.permute.xlu0 %2089
        %2091 = vrot.lane.b32.xlu0 %v2086, 122
        %v2092 = vpop.permute.xlu0 %2091
        %v2095 = vadd.f32 %v1780, %v2090
        %v2096 = vadd.f32 %v1781, %v2092
        %v2097 = vstv %s2083
        %v2098 = vmul.f32 %v2097, %v522
        %v2099 = vmul.f32 %v2097, %v523
        %2102 = vrot.lane.b32.xlu0 %v2098, 122
        %v2103 = vpop.permute.xlu0 %2102
        %2104 = vrot.lane.b32.xlu0 %v2099, 122
        %v2105 = vpop.permute.xlu0 %2104
        %v2108 = vadd.f32 %v1800, %v2103
        %v2109 = vadd.f32 %v1801, %v2105
        %s2110 = sld [smem:[#allocation4 + $0xd]]
        %s2111 = sld [smem:[#allocation4 + $0x3e]]
        %v2112 = vstv %s2110
        %v2113 = vmul.f32 %v2112, %v519
        %v2114 = vmul.f32 %v2112, %v520
        %v2115 = vmul.f32 %v2112, %v521
        %v2119 = vrot.slane %v2113, 1
        %v2120 = vrot.slane %v2114, 1
        %v2121 = vsel %vm546, %v2119, %v2120
        %v2122 = vrot.slane %v2115, 1
        %v2123 = vsel %vm546, %v2120, %v2122
        %2124 = vrot.lane.b32.xlu0 %v2121, 122
        %v2125 = vpop.permute.xlu0 %2124
        %2126 = vrot.lane.b32.xlu0 %v2123, 122
        %v2127 = vpop.permute.xlu0 %2126
        %v2130 = vadd.f32 %v2095, %v2125
        %v2131 = vadd.f32 %v2096, %v2127
        %v2132 = vstv %s2111
        %v2133 = vmul.f32 %v2132, %v522
        %v2134 = vmul.f32 %v2132, %v523
        %v2135 = vmul.f32 %v2132, %v524
        %v2139 = vrot.slane %v2133, 1
        %v2140 = vrot.slane %v2134, 1
        %v2141 = vsel %vm546, %v2139, %v2140
        %v2142 = vrot.slane %v2135, 1
        %v2143 = vsel %vm546, %v2140, %v2142
        %2144 = vrot.lane.b32.xlu0 %v2141, 122
        %v2145 = vpop.permute.xlu0 %2144
        %2146 = vrot.lane.b32.xlu0 %v2143, 122
        %v2147 = vpop.permute.xlu0 %2146
        %v2150 = vadd.f32 %v2108, %v2145
        %v2151 = vadd.f32 %v2109, %v2147
        %s2152 = sld [smem:[#allocation4 + $0x14]]
        %s2153 = sld [smem:[#allocation4 + $0x45]]
        %v2154 = vstv %s2152
        %v2155 = vmul.f32 %v2154, %v519
        %v2156 = vmul.f32 %v2154, %v520
        %v2157 = vmul.f32 %v2154, %v521
        %v2161 = vrot.slane %v2155, 2
        %v2162 = vrot.slane %v2156, 2
        %v2163 = vsel %vm581, %v2161, %v2162
        %v2164 = vrot.slane %v2157, 2
        %v2165 = vsel %vm581, %v2162, %v2164
        %2166 = vrot.lane.b32.xlu0 %v2163, 122
        %v2167 = vpop.permute.xlu0 %2166
        %2168 = vrot.lane.b32.xlu0 %v2165, 122
        %v2169 = vpop.permute.xlu0 %2168
        %v2172 = vadd.f32 %v2130, %v2167
        %v2173 = vadd.f32 %v2131, %v2169
        %v2174 = vstv %s2153
        %v2175 = vmul.f32 %v2174, %v522
        %v2176 = vmul.f32 %v2174, %v523
        %v2177 = vmul.f32 %v2174, %v524
        %v2181 = vrot.slane %v2175, 2
        %v2182 = vrot.slane %v2176, 2
        %v2183 = vsel %vm581, %v2181, %v2182
        %v2184 = vrot.slane %v2177, 2
        %v2185 = vsel %vm581, %v2182, %v2184
        %2186 = vrot.lane.b32.xlu0 %v2183, 122
        %v2187 = vpop.permute.xlu0 %2186
        %2188 = vrot.lane.b32.xlu0 %v2185, 122
        %v2189 = vpop.permute.xlu0 %2188
        %v2192 = vadd.f32 %v2150, %v2187
        %v2193 = vadd.f32 %v2151, %v2189
        %s2194 = sld [smem:[#allocation4 + $0x1b]]
        %s2195 = sld [smem:[#allocation4 + $0x4c]]
        %v2196 = vstv %s2194
        %v2197 = vmul.f32 %v2196, %v519
        %v2198 = vmul.f32 %v2196, %v520
        %v2199 = vmul.f32 %v2196, %v521
        %v2203 = vrot.slane %v2197, 3
        %v2204 = vrot.slane %v2198, 3
        %v2205 = vsel %vm616, %v2203, %v2204
        %v2206 = vrot.slane %v2199, 3
        %v2207 = vsel %vm616, %v2204, %v2206
        %2208 = vrot.lane.b32.xlu0 %v2205, 122
        %v2209 = vpop.permute.xlu0 %2208
        %2210 = vrot.lane.b32.xlu0 %v2207, 122
        %v2211 = vpop.permute.xlu0 %2210
        %v2214 = vadd.f32 %v2172, %v2209
        %v2215 = vadd.f32 %v2173, %v2211
        %v2216 = vstv %s2195
        %v2217 = vmul.f32 %v2216, %v522
        %v2218 = vmul.f32 %v2216, %v523
        %v2219 = vmul.f32 %v2216, %v524
        %v2223 = vrot.slane %v2217, 3
        %v2224 = vrot.slane %v2218, 3
        %v2225 = vsel %vm616, %v2223, %v2224
        %v2226 = vrot.slane %v2219, 3
        %v2227 = vsel %vm616, %v2224, %v2226
        %2228 = vrot.lane.b32.xlu0 %v2225, 122
        %v2229 = vpop.permute.xlu0 %2228
        %2230 = vrot.lane.b32.xlu0 %v2227, 122
        %v2231 = vpop.permute.xlu0 %2230
        %v2234 = vadd.f32 %v2192, %v2229
        %v2235 = vadd.f32 %v2193, %v2231
        %s2236 = sld [smem:[#allocation4 + $0x22]]
        %s2237 = sld [smem:[#allocation4 + $0x53]]
        %v2238 = vstv %s2236
        %v2239 = vmul.f32 %v2238, %v519
        %v2240 = vmul.f32 %v2238, %v520
        %v2241 = vmul.f32 %v2238, %v521
        %v2245 = vrot.slane %v2239, 4
        %v2246 = vrot.slane %v2240, 4
        %v2247 = vsel %vm176, %v2245, %v2246
        %v2248 = vrot.slane %v2241, 4
        %v2249 = vsel %vm176, %v2246, %v2248
        %2250 = vrot.lane.b32.xlu0 %v2247, 122
        %v2251 = vpop.permute.xlu0 %2250
        %2252 = vrot.lane.b32.xlu0 %v2249, 122
        %v2253 = vpop.permute.xlu0 %2252
        %v2256 = vadd.f32 %v2214, %v2251
        %v2257 = vadd.f32 %v2215, %v2253
        %v2258 = vstv %s2237
        %v2259 = vmul.f32 %v2258, %v522
        %v2260 = vmul.f32 %v2258, %v523
        %v2261 = vmul.f32 %v2258, %v524
        %v2265 = vrot.slane %v2259, 4
        %v2266 = vrot.slane %v2260, 4
        %v2267 = vsel %vm176, %v2265, %v2266
        %v2268 = vrot.slane %v2261, 4
        %v2269 = vsel %vm176, %v2266, %v2268
        %2270 = vrot.lane.b32.xlu0 %v2267, 122
        %v2271 = vpop.permute.xlu0 %2270
        %2272 = vrot.lane.b32.xlu0 %v2269, 122
        %v2273 = vpop.permute.xlu0 %2272
        %v2276 = vadd.f32 %v2234, %v2271
        %v2277 = vadd.f32 %v2235, %v2273
        %s2278 = sld [smem:[#allocation4 + $0x29]]
        %s2279 = sld [smem:[#allocation4 + $0x5a]]
        %v2280 = vstv %s2278
        %v2281 = vmul.f32 %v2280, %v519
        %v2282 = vmul.f32 %v2280, %v520
        %v2283 = vmul.f32 %v2280, %v521
        %v2287 = vrot.slane %v2281, 5
        %v2288 = vrot.slane %v2282, 5
        %v2289 = vsel %vm685, %v2287, %v2288
        %v2290 = vrot.slane %v2283, 5
        %v2291 = vsel %vm685, %v2288, %v2290
        %2292 = vrot.lane.b32.xlu0 %v2289, 122
        %v2293 = vpop.permute.xlu0 %2292
        %2294 = vrot.lane.b32.xlu0 %v2291, 122
        %v2295 = vpop.permute.xlu0 %2294
        %v2298 = vadd.f32 %v2256, %v2293
        %v2299 = vadd.f32 %v2257, %v2295
        %v2300 = vstv %s2279
        %v2301 = vmul.f32 %v2300, %v522
        %v2302 = vmul.f32 %v2300, %v523
        %v2303 = vmul.f32 %v2300, %v524
        %v2307 = vrot.slane %v2301, 5
        %v2308 = vrot.slane %v2302, 5
        %v2309 = vsel %vm685, %v2307, %v2308
        %v2310 = vrot.slane %v2303, 5
        %v2311 = vsel %vm685, %v2308, %v2310
        %2312 = vrot.lane.b32.xlu0 %v2309, 122
        %v2313 = vpop.permute.xlu0 %2312
        %2314 = vrot.lane.b32.xlu0 %v2311, 122
        %v2315 = vpop.permute.xlu0 %2314
        %v2318 = vadd.f32 %v2276, %v2313
        %v2319 = vadd.f32 %v2277, %v2315
        %s2320 = sld [smem:[#allocation4 + $0x30]]
        %s2321 = sld [smem:[#allocation4 + $0x61]]
        %v2322 = vstv %s2320
        %v2323 = vmul.f32 %v2322, %v519
        %v2324 = vmul.f32 %v2322, %v520
        %v2325 = vmul.f32 %v2322, %v521
        %v2329 = vrot.slane %v2323, 6
        %v2330 = vrot.slane %v2324, 6
        %v2331 = vsel %vm720, %v2329, %v2330
        %v2332 = vrot.slane %v2325, 6
        %v2333 = vsel %vm720, %v2330, %v2332
        %2334 = vrot.lane.b32.xlu0 %v2331, 122
        %v2335 = vpop.permute.xlu0 %2334
        %2336 = vrot.lane.b32.xlu0 %v2333, 122
        %v2337 = vpop.permute.xlu0 %2336
        %v2340 = vadd.f32 %v2298, %v2335
        %v2341 = vadd.f32 %v2299, %v2337
        %v2342 = vstv %s2321
        %v2343 = vmul.f32 %v2342, %v522
        %v2344 = vmul.f32 %v2342, %v523
        %v2345 = vmul.f32 %v2342, %v524
        %v2349 = vrot.slane %v2343, 6
        %v2350 = vrot.slane %v2344, 6
        %v2351 = vsel %vm720, %v2349, %v2350
        %v2352 = vrot.slane %v2345, 6
        %v2353 = vsel %vm720, %v2350, %v2352
        %2354 = vrot.lane.b32.xlu0 %v2351, 122
        %v2355 = vpop.permute.xlu0 %2354
        %2356 = vrot.lane.b32.xlu0 %v2353, 122
        %v2357 = vpop.permute.xlu0 %2356
        %v2360 = vadd.f32 %v2318, %v2355
        %v2361 = vadd.f32 %v2319, %v2357
        %2364 = vrot.lane.b32.xlu0 %v2060, 127
        %v2365 = vpop.permute.xlu0 %2364
        %2366 = vrot.lane.b32.xlu0 %v2061, 127
        %v2367 = vpop.permute.xlu0 %2366
        %v2370 = vadd.f32 %v2340, %v2365
        %v2371 = vadd.f32 %v2341, %v2367
        %2374 = vrot.lane.b32.xlu0 %v2080, 127
        %v2375 = vpop.permute.xlu0 %2374
        %2376 = vrot.lane.b32.xlu0 %v2081, 127
        %v2377 = vpop.permute.xlu0 %2376
        %v2380 = vadd.f32 %v2360, %v2375
        %v2381 = vadd.f32 %v2361, %v2377
        %v2382 = vadd.f32 %v2370, %v2380
        %v2383 = vadd.f32 %v2371, %v2381
        %s2384 = sld [smem:[#allocation4 + $0x62]]
        %v2385 = vstv %s2384
        %v2386 = vadd.f32 %v2382, %v2385
        %v2387 = vadd.f32 %v2383, %v2385
        %v2388 = vxor.u32 %v2386, 2147483648
        %v2389 = vxor.u32 %v2387, 2147483648
        %v2390 = vmul.f32 %v2388, 1.442695
        %v2391 = vpow.pop %v2390
        %v2392 = vmul.f32 %v2389, 1.442695
        %v2393 = vpow.pop %v2392
        %v2394 = vadd.f32 %v2391, 1.0
        %v2395 = vadd.f32 %v2393, 1.0
        %v2396 = vrcp.pop %v2394
        %v2397 = vmul.f32 1.0, %v2396
        %v2398 = vrcp.pop %v2395
        %v2399 = vmul.f32 1.0, %v2398
        %v2400 = vcombine.high %v2397, 0.0
        %v2402 = vunpack.c.l.s4 1983009808
        %v2403 = vunpack.c.0.s8 %v2402
        %v2404 = vlaneseq
        %v2405 = vshrl.u32 %v2404, 7
        %v2406 = vsub.s32 %v2403, %v2405
        %v2407 = vrot.slane %v2397, %v2406
        %v2409 = vunpack.c.l.s4 1983009808
        %v2410 = vunpack.c.0.s8 %v2409
        %v2411 = vlaneseq
        %v2412 = vshrl.u32 %v2411, 7
        %v2413 = vsub.s32 %v2410, %v2412
        %v2414 = vrot.slane %v2400, %v2413
        %v2415 = vcombine.high %v2407, 0.0
        %v2417 = vunpack.c.l.s4 1934713408
        %v2418 = vunpack.c.0.s8 %v2417
        %v2419 = vlaneseq
        %v2420 = vshrl.u32 %v2419, 7
        %v2421 = vsub.s32 %v2418, %v2420
        %v2422 = vrot.slane %v2407, %v2421
        %v2424 = vunpack.c.l.s4 1934713408
        %v2425 = vunpack.c.0.s8 %v2424
        %v2426 = vlaneseq
        %v2427 = vshrl.u32 %v2426, 7
        %v2428 = vsub.s32 %v2425, %v2427
        %v2429 = vrot.slane %v2415, %v2428
        %v2430 = vcombine.high %v2414, 0.0
        %v2432 = vunpack.c.l.s4 1934713408
        %v2433 = vunpack.c.0.s8 %v2432
        %v2434 = vlaneseq
        %v2435 = vshrl.u32 %v2434, 7
        %v2436 = vsub.s32 %v2433, %v2435
        %v2437 = vrot.slane %v2414, %v2436
        %v2439 = vunpack.c.l.s4 1934713408
        %v2440 = vunpack.c.0.s8 %v2439
        %v2441 = vlaneseq
        %v2442 = vshrl.u32 %v2441, 7
        %v2443 = vsub.s32 %v2440, %v2442
        %v2444 = vrot.slane %v2430, %v2443
        %v2445 = vcombine.high %v2422, 0.0
        %v2446 = vcombine.high %v2429, 0.0
        %v2447 = vcombine.high %v2437, 0.0
        %v2448 = vcombine.high %v2444, 0.0
        %v2449 = vcombine.high %v2399, 0.0
        %v2451 = vunpack.c.l.s4 1983009808
        %v2452 = vunpack.c.0.s8 %v2451
        %v2453 = vlaneseq
        %v2454 = vshrl.u32 %v2453, 7
        %v2455 = vsub.s32 %v2452, %v2454
        %v2456 = vrot.slane %v2399, %v2455
        %v2458 = vunpack.c.l.s4 1983009808
        %v2459 = vunpack.c.0.s8 %v2458
        %v2460 = vlaneseq
        %v2461 = vshrl.u32 %v2460, 7
        %v2462 = vsub.s32 %v2459, %v2461
        %v2463 = vrot.slane %v2449, %v2462
        %v2464 = vcombine.high %v2456, 0.0
        %v2466 = vunpack.c.l.s4 1934713408
        %v2467 = vunpack.c.0.s8 %v2466
        %v2468 = vlaneseq
        %v2469 = vshrl.u32 %v2468, 7
        %v2470 = vsub.s32 %v2467, %v2469
        %v2471 = vrot.slane %v2456, %v2470
        %v2473 = vunpack.c.l.s4 1934713408
        %v2474 = vunpack.c.0.s8 %v2473
        %v2475 = vlaneseq
        %v2476 = vshrl.u32 %v2475, 7
        %v2477 = vsub.s32 %v2474, %v2476
        %v2478 = vrot.slane %v2464, %v2477
        %v2479 = vcombine.high %v2463, 0.0
        %v2481 = vunpack.c.l.s4 1934713408
        %v2482 = vunpack.c.0.s8 %v2481
        %v2483 = vlaneseq
        %v2484 = vshrl.u32 %v2483, 7
        %v2485 = vsub.s32 %v2482, %v2484
        %v2486 = vrot.slane %v2463, %v2485
        %v2488 = vunpack.c.l.s4 1934713408
        %v2489 = vunpack.c.0.s8 %v2488
        %v2490 = vlaneseq
        %v2491 = vshrl.u32 %v2490, 7
        %v2492 = vsub.s32 %v2489, %v2491
        %v2493 = vrot.slane %v2479, %v2492
        %v2494 = vcombine.high %v2471, 0.0
        %v2495 = vcombine.high %v2478, 0.0
        %v2496 = vcombine.high %v2486, 0.0
        %v2497 = vcombine.high %v2493, 0.0
        %2499 = vrot.lane.b32.xlu0 %v2445, 16
        %v2500 = vpop.permute.xlu0 %2499
        %2503 = vrot.lane.b32.xlu0 %v2429, 32
        %v2504 = vpop.permute.xlu0 %2503
        %2507 = vrot.lane.b32.xlu0 %v2446, 48
        %v2508 = vpop.permute.xlu0 %2507
        %2511 = vrot.lane.b32.xlu0 %v2437, 64
        %v2512 = vpop.permute.xlu0 %2511
        %2515 = vrot.lane.b32.xlu0 %v2447, 80
        %v2516 = vpop.permute.xlu0 %2515
        %2519 = vrot.lane.b32.xlu0 %v2444, 96
        %v2520 = vpop.permute.xlu0 %2519
        %2523 = vrot.lane.b32.xlu0 %v2448, 112
        %v2524 = vpop.permute.xlu0 %2523
        %2527 = vrot.lane.b32.xlu0 %v2494, 16
        %v2528 = vpop.permute.xlu0 %2527
        %2531 = vrot.lane.b32.xlu0 %v2478, 32
        %v2532 = vpop.permute.xlu0 %2531
        %2535 = vrot.lane.b32.xlu0 %v2495, 48
        %v2536 = vpop.permute.xlu0 %2535
        %2539 = vrot.lane.b32.xlu0 %v2486, 64
        %v2540 = vpop.permute.xlu0 %2539
        %2543 = vrot.lane.b32.xlu0 %v2496, 80
        %v2544 = vpop.permute.xlu0 %2543
        %2547 = vrot.lane.b32.xlu0 %v2493, 96
        %v2548 = vpop.permute.xlu0 %2547
        %2551 = vrot.lane.b32.xlu0 %v2497, 112
        %v2552 = vpop.permute.xlu0 %2551
        %vm2554 = vcmask 130048
        %v2555 = vsel %vm2554, %v2422, %v2500
        %vm2556 = vcmask 261120
        %v2557 = vsel %vm2556, %v2555, %v2504
        %vm2558 = vcmask 392192
        %v2559 = vsel %vm2558, %v2557, %v2508
        %vm2560 = vcmask 523264
        %v2561 = vsel %vm2560, %v2559, %v2512
        %vm2562 = vcmask 654336
        %v2563 = vsel %vm2562, %v2561, %v2516
        %vm2564 = vcmask 785408
        %v2565 = vsel %vm2564, %v2563, %v2520
        %vm2566 = vcmask 916480
        %v2567 = vsel %vm2566, %v2565, %v2524
        %v2568 = vsel %vm2554, %v2471, %v2528
        %v2569 = vsel %vm2556, %v2568, %v2532
        %v2570 = vsel %vm2558, %v2569, %v2536
        %v2571 = vsel %vm2560, %v2570, %v2540
        %v2572 = vsel %vm2562, %v2571, %v2544
        %v2573 = vsel %vm2564, %v2572, %v2548
        %v2574 = vsel %vm2566, %v2573, %v2552
        %v2575 = vld [vmem:[%s150] sm:$0xff]
        %v2576 = vlaneseq
        %v2577 = vshrl.u32 %v2576, 7
        %v2578 = vsub.s32 0, %v2577
        %v2579 = vrot.slane %v2567, %v2578
        %v2580 = vlaneseq
        %v2581 = vshrl.u32 %v2580, 7
        %v2582 = vsub.s32 0, %v2581
        %v2583 = vrot.slane %v2574, %v2582
        %v2586 = vcombine.low %v2579, %v2583
        %v2588 = vmul.f32 %v2575, %v2586
        %2589 = vst [vmem:[%s171] sm:$0xff] %v2588
        %s2590 = sand.u32 %s75, 1
        %s2591 = scalar_lea.sflag [#allocation6], %s2590
        %s2592 = sand.u32 %s75, 1
        %s2593 = smul.addr %s2592, 8
        %s2594 = scalar_lea.vmem [#allocation9], %s2593
        // Predicated region
        $region37: #{tpu_custom_call.1} parent=27 // pred_check
          %p2595 = pneg %p85
        $region38: #{tpu_custom_call.1} parent=27 // pred_check_branch
          %2597 = sbr.rel (%p2595) target = $region40
        $region39: #{tpu_custom_call.1} parent=27 // pred_region
          %s2599 = ssub.s32 128, 128
          %2600 = vsyncadd %s2591, %s2599
          %s2601 = smul.addr %s20, 2
          %s2602 = smul.addr %s2601, 64
          %s2603 = scalar_lea.hbm %s2, %s2602
          %s2605 = sshll.u32 %s2594, 4
          %s2606 = int_to_ptr.vmem [resolvable:$true] %s2605
          %2608 = dma.vmem_to_hbm [thread:$0]  %s2606, 128, %s2603, %s2591
        $region40: #{tpu_custom_call.1} parent=27 // pred_fallthru
          _
      $region28: #{tpu_custom_call.1} parent=5 // pred_fallthru
        _
      %p2609 = scmp.le.s32.totalorder 2, %s15
      // Predicated region
      $region41: #{tpu_custom_call.1} parent=5 // pred_check
        %p2610 = pneg %p2609
      $region42: #{tpu_custom_call.1} parent=5 // pred_check_branch
        %2612 = sbr.rel (%p2610) target = $region44
      $region43: #{tpu_custom_call.1} parent=5 // pred_region
        %s2613 = ssub.s32 %s15, 2
        // Predicated region
        $region45: #{tpu_custom_call.1} parent=43 // pred_check
          %p2614 = pneg %p91
        $region46: #{tpu_custom_call.1} parent=43 // pred_check_branch
          %2616 = sbr.rel (%p2614) target = $region48
        $region47: #{tpu_custom_call.1} parent=43 // pred_region
          %s2617 = sand.u32 %s76, 1
          %s2618 = scalar_lea.sflag [#allocation6], %s2617
          %s2619 = sand.u32 %s76, 1
          %s2620 = smul.addr %s2619, 8
          %s2621 = scalar_lea.vmem [#allocation9], %s2620
          %2622 = dma.done %s2618, 128
        $region48: #{tpu_custom_call.1} parent=43 // pred_fallthru
          _
      $region44: #{tpu_custom_call.1} parent=5 // pred_fallthru
        _
    $region6: #{tpu_custom_call.1} parent=1 // loop_footer
      %s19 = sadd.s32 1, %s15
    $region7: #{tpu_custom_call.1} parent=1 // loop_footer_branch
      %14 = sbr.rel target = $region3
    $region8: #{tpu_custom_call.1} parent=1 // loop_exit
      _
    %2623 = vsyncpa [#allocation5], 1
    %s2624 = scalar_lea.sflag [#allocation5], 1
    %2625 = vsyncpa %s2624, 1
    %2626 = vsyncpa [#allocation6], 1
    %s2627 = scalar_lea.sflag [#allocation6], 1
    %2628 = vsyncpa %s2627, 1
    %2629 = vsyncpa [#allocation7], 1
    %s2630 = scalar_lea.sflag [#allocation7], 1
    %2631 = vsyncpa %s2630, 1

</llo_original>
